<compile_context>
chip_gen: v7x
topology: tpu7x:2x2x1
jax: 0.10.0
libtpu: 0.0.40
codegen_flags: <defaults>
</compile_context>

<pallas_src>
from functools import partial

import jax
import jax.numpy as jnp
from jax.experimental import pallas as pl
from jax.experimental.pallas import tpu as pltpu


# ----------------------------------------------------------------------------
# Fused attention kernel: one batch element per grid step
# ----------------------------------------------------------------------------
def _attention_kernel(x_ref, wqkv_ref, wproj_ref, bproj_ref,
                      out_ref, attn_ref, *, num_heads, N, C, scale):
    head_dim = C // num_heads
    xb = x_ref[0]                                                     # (N, C)

    # Fused QKV projection (qkv_bias=False in the module): single MXU matmul for all heads.
    qkv = jnp.dot(xb, wqkv_ref[...], preferred_element_type=jnp.float32)   # (N, 3C)

    head_outs = []
    for h in range(num_heads):                                        # static unrolled head loop
        lo = h * head_dim
        q = qkv[:, lo:lo + head_dim] * scale                          # (N, hd)
        k = qkv[:, C + lo:C + lo + head_dim]                          # (N, hd)
        v = qkv[:, 2 * C + lo:2 * C + lo + head_dim]                  # (N, hd)

        # scores = q @ k^T  (contract over head_dim), f32 accumulation on the MXU
        s = jax.lax.dot_general(q, k, (((1,), (1,)), ((), ())),
                                preferred_element_type=jnp.float32)   # (N, N)

        # numerically-stable softmax over the last axis (attn_drop is identity at p=0.0)
        s = s - jnp.max(s, axis=-1, keepdims=True)
        e = jnp.exp(s)
        p = e / jnp.sum(e, axis=-1, keepdims=True)                    # (N, N)

        attn_ref[0, h] = p                                            # attention-probs output
        head_outs.append(jnp.dot(p, v, preferred_element_type=jnp.float32))   # (N, hd)

    # concat over heads == (attn @ v).transpose(1, 2).reshape(B, N, C) in the torch module
    ctx = jnp.concatenate(head_outs, axis=-1)                         # (N, C)

    # output projection (proj has bias; proj_drop is identity at p=0.0)
    y = jnp.dot(ctx, wproj_ref[...], preferred_element_type=jnp.float32) + bproj_ref[...]
    out_ref[0] = y


# ----------------------------------------------------------------------------
# Wrapper
# ----------------------------------------------------------------------------
def attention_forward(x, w_qkv, w_proj, b_proj, *, num_heads):
    """x: (B, N, C); w_qkv: (C, 3C) (x @ w layout); w_proj: (C, C); b_proj: (C,).
    Returns (out, attn, {}) matching the PyTorch module's forward."""
    B, N, C = x.shape
    assert C % num_heads == 0
    head_dim = C // num_heads
    scale = head_dim ** (-0.5)
    b_proj2 = b_proj.reshape(1, C)

    # TODO(synk): optional attn_bias argument of forward() not implemented (default path is None).
    out, attn = pl.pallas_call(
        partial(_attention_kernel, num_heads=num_heads, N=N, C=C, scale=scale),
        out_shape=(jax.ShapeDtypeStruct((B, N, C), jnp.float32),
                   jax.ShapeDtypeStruct((B, num_heads, N, N), jnp.float32)),
        grid=(B,),
        in_specs=[pl.BlockSpec((1, N, C), lambda b: (b, 0, 0)),
                  pl.BlockSpec((C, 3 * C), lambda b: (0, 0)),
                  pl.BlockSpec((C, C), lambda b: (0, 0)),
                  pl.BlockSpec((1, C), lambda b: (0, 0))],
        out_specs=(pl.BlockSpec((1, N, C), lambda b: (b, 0, 0)),
                   pl.BlockSpec((1, num_heads, N, N), lambda b: (b, 0, 0, 0))),
        compiler_params=pltpu.CompilerParams(
            dimension_semantics=("parallel",),
            vmem_limit_bytes=32 * 1024 * 1024),
    )(x, w_qkv, w_proj, b_proj2)

    return out, attn, {}


# ----------------------------------------------------------------------------
# Pure-JAX reference (same math, XLA ops) for correctness checking
# ----------------------------------------------------------------------------
def ref_forward(x, w_qkv, w_proj, b_proj, *, num_heads):
    B, N, C = x.shape
    hd = C // num_heads
    scale = hd ** (-0.5)
    qkv = x @ w_qkv                                                    # (B, N, 3C)
    qkv = qkv.reshape(B, N, 3, num_heads, hd).transpose(2, 0, 3, 1, 4)  # (3, B, H, N, hd)
    q, k, v = qkv[0] * scale, qkv[1], qkv[2]
    attn = jnp.einsum('bhnd,bhmd->bhnm', q, k)
    attn = jax.nn.softmax(attn, axis=-1)
    ctx = jnp.einsum('bhnm,bhmd->bhnd', attn, v)
    ctx = ctx.transpose(0, 2, 1, 3).reshape(B, N, C)
    out = ctx @ w_proj + b_proj[None, None, :]
    return out, attn


if __name__ == "__main__":
    B, N, C = 2, 8, 32          # batch=2, seq=8, hidden=32
    num_heads = 8               # module default -> head_dim = 4

    key = jax.random.PRNGKey(0)
    ks = jax.random.split(key, 4)
    x = jax.random.normal(ks[0], (B, N, C), jnp.float32)
    # TODO(synk): PyTorch Linear uses kaiming-uniform init; deterministic scaled-normal used here.
    w_qkv = 0.1 * jax.random.normal(ks[1], (C, 3 * C), jnp.float32)    # qkv_bias=False (default)
    w_proj = 0.1 * jax.random.normal(ks[2], (C, C), jnp.float32)
    b_proj = 0.1 * jax.random.normal(ks[3], (C,), jnp.float32)

    out, attn, extras = attention_forward(x, w_qkv, w_proj, b_proj, num_heads=num_heads)
    out = jax.block_until_ready(out)
    attn = jax.block_until_ready(attn)

    ref_out, ref_attn = ref_forward(x, w_qkv, w_proj, b_proj, num_heads=num_heads)
    assert out.shape == (B, N, C), out.shape
    assert attn.shape == (B, num_heads, N, N), attn.shape
    err_out = float(jnp.max(jnp.abs(out - ref_out)))
    err_attn = float(jnp.max(jnp.abs(attn - ref_attn)))
    assert err_out < 1e-4, f"max abs error (out) {err_out}"
    assert err_attn < 1e-4, f"max abs error (attn) {err_attn}"
    print("KERNEL_OK")
</pallas_src>

<mosaic_0001>
module attributes {stable_mosaic.version = 11 : i64} {
  func.func @_attention_kernel(%arg0: i32, %arg1: memref<1x8x32xf32, #tpu.memory_space<vmem>>, %arg2: memref<32x96xf32, #tpu.memory_space<vmem>>, %arg3: memref<32x32xf32, #tpu.memory_space<vmem>>, %arg4: memref<1x32xf32, #tpu.memory_space<vmem>>, %arg5: memref<1x8x32xf32, #tpu.memory_space<vmem>>, %arg6: memref<1x8x8x8xf32, #tpu.memory_space<vmem>>) attributes {dimension_semantics = [#tpu.dimension_semantics<parallel>], iteration_bounds = array<i64: 2>, scalar_prefetch = 0 : i64, scratch_operands = 0 : i64, tpu.core_type = #tpu.core_type<tc>, window_params = [{transform_indices = @transform_0, window_bounds = array<i64: 1, 8, 32>}, {pipeline_mode = #tpu.pipeline_mode<synchronous>, transform_indices = @transform_1, window_bounds = array<i64: 32, 96>}, {pipeline_mode = #tpu.pipeline_mode<synchronous>, transform_indices = @transform_2, window_bounds = array<i64: 32, 32>}, {pipeline_mode = #tpu.pipeline_mode<synchronous>, transform_indices = @transform_3, window_bounds = array<i64: 1, 32>}, {transform_indices = @transform_4, window_bounds = array<i64: 1, 8, 32>}, {transform_indices = @transform_5, window_bounds = array<i64: 1, 8, 8, 8>}]} {
    %c0 = arith.constant 0 : index
    %c0_0 = arith.constant 0 : index
    %c0_1 = arith.constant 0 : index
    %0 = vector.load %arg1[%c0, %c0_0, %c0_1] : memref<1x8x32xf32, #tpu.memory_space<vmem>>, vector<1x8x32xf32>
    %1 = vector.shape_cast %0 : vector<1x8x32xf32> to vector<8x32xf32>
    %c0_2 = arith.constant 0 : index
    %c0_3 = arith.constant 0 : index
    %2 = vector.load %arg2[%c0_2, %c0_3] : memref<32x96xf32, #tpu.memory_space<vmem>>, vector<32x96xf32>
    %cst = arith.constant dense<0.000000e+00> : vector<8x96xf32>
    %3 = tpu.matmul %1, %2, %cst {dimension_numbers = #tpu.dot_dimension_numbers<[1], [0], [0], [1], [0, 0, 1, 1], [], []>} : vector<8x32xf32>, vector<32x96xf32>, vector<8x96xf32> -> vector<8x96xf32>
    %4 = vector.extract_strided_slice %3 {offsets = [0, 0], sizes = [8, 4], strides = [1, 1]} : vector<8x96xf32> to vector<8x4xf32>
    %cst_4 = arith.constant 5.000000e-01 : f32
    %5 = vector.broadcast %cst_4 : f32 to vector<8x4xf32>
    %6 = arith.mulf %4, %5 : vector<8x4xf32>
    %7 = vector.extract_strided_slice %3 {offsets = [0, 32], sizes = [8, 4], strides = [1, 1]} : vector<8x96xf32> to vector<8x4xf32>
    %8 = vector.extract_strided_slice %3 {offsets = [0, 64], sizes = [8, 4], strides = [1, 1]} : vector<8x96xf32> to vector<8x4xf32>
    %cst_5 = arith.constant dense<0.000000e+00> : vector<8x8xf32>
    %9 = tpu.matmul %6, %7, %cst_5 {dimension_numbers = #tpu.dot_dimension_numbers<[1], [1], [0], [0], [0, 0, 1, 0], [], []>} : vector<8x4xf32>, vector<8x4xf32>, vector<8x8xf32> -> vector<8x8xf32>
    %cst_6 = arith.constant dense<0xFF800000> : vector<8xf32>
    %10 = vector.multi_reduction <maximumf>, %9, %cst_6 [1] : vector<8x8xf32> to vector<8xf32>
    %11 = vector.shape_cast %10 : vector<8xf32> to vector<8x1xf32>
    %12 = vector.broadcast %11 : vector<8x1xf32> to vector<8x8xf32>
    %13 = arith.subf %9, %12 : vector<8x8xf32>
    %14 = math.exp %13 : vector<8x8xf32>
    %cst_7 = arith.constant dense<0.000000e+00> : vector<8xf32>
    %15 = vector.multi_reduction <add>, %14, %cst_7 [1] : vector<8x8xf32> to vector<8xf32>
    %16 = vector.shape_cast %15 : vector<8xf32> to vector<8x1xf32>
    %17 = vector.broadcast %16 : vector<8x1xf32> to vector<8x8xf32>
    %18 = arith.divf %14, %17 : vector<8x8xf32>
    %c0_8 = arith.constant 0 : index
    %c0_9 = arith.constant 0 : index
    %c0_10 = arith.constant 0 : index
    %c0_11 = arith.constant 0 : index
    %19 = vector.load %arg6[%c0_8, %c0_9, %c0_10, %c0_11] : memref<1x8x8x8xf32, #tpu.memory_space<vmem>>, vector<1x1x8x8xf32>
    %20 = vector.shape_cast %19 : vector<1x1x8x8xf32> to vector<8x8xf32>
    %21 = vector.shape_cast %18 : vector<8x8xf32> to vector<1x1x8x8xf32>
    tpu.vector_store %arg6[%c0_8, %c0_9, %c0_10, %c0_11], %21 {strides = array<i32>} : memref<1x8x8x8xf32, #tpu.memory_space<vmem>>, vector<1x1x8x8xf32>,
    %cst_12 = arith.constant dense<0.000000e+00> : vector<8x4xf32>
    %22 = tpu.matmul %18, %8, %cst_12 {dimension_numbers = #tpu.dot_dimension_numbers<[1], [0], [0], [1], [0, 0, 1, 1], [], []>} : vector<8x8xf32>, vector<8x4xf32>, vector<8x4xf32> -> vector<8x4xf32>
    %23 = vector.extract_strided_slice %3 {offsets = [0, 4], sizes = [8, 4], strides = [1, 1]} : vector<8x96xf32> to vector<8x4xf32>
    %cst_13 = arith.constant 5.000000e-01 : f32
    %24 = vector.broadcast %cst_13 : f32 to vector<8x4xf32>
    %25 = arith.mulf %23, %24 : vector<8x4xf32>
    %26 = vector.extract_strided_slice %3 {offsets = [0, 36], sizes = [8, 4], strides = [1, 1]} : vector<8x96xf32> to vector<8x4xf32>
    %27 = vector.extract_strided_slice %3 {offsets = [0, 68], sizes = [8, 4], strides = [1, 1]} : vector<8x96xf32> to vector<8x4xf32>
    %cst_14 = arith.constant dense<0.000000e+00> : vector<8x8xf32>
    %28 = tpu.matmul %25, %26, %cst_14 {dimension_numbers = #tpu.dot_dimension_numbers<[1], [1], [0], [0], [0, 0, 1, 0], [], []>} : vector<8x4xf32>, vector<8x4xf32>, vector<8x8xf32> -> vector<8x8xf32>
    %cst_15 = arith.constant dense<0xFF800000> : vector<8xf32>
    %29 = vector.multi_reduction <maximumf>, %28, %cst_15 [1] : vector<8x8xf32> to vector<8xf32>
    %30 = vector.shape_cast %29 : vector<8xf32> to vector<8x1xf32>
    %31 = vector.broadcast %30 : vector<8x1xf32> to vector<8x8xf32>
    %32 = arith.subf %28, %31 : vector<8x8xf32>
    %33 = math.exp %32 : vector<8x8xf32>
    %cst_16 = arith.constant dense<0.000000e+00> : vector<8xf32>
    %34 = vector.multi_reduction <add>, %33, %cst_16 [1] : vector<8x8xf32> to vector<8xf32>
    %35 = vector.shape_cast %34 : vector<8xf32> to vector<8x1xf32>
    %36 = vector.broadcast %35 : vector<8x1xf32> to vector<8x8xf32>
    %37 = arith.divf %33, %36 : vector<8x8xf32>
    %c0_17 = arith.constant 0 : index
    %c1 = arith.constant 1 : index
    %c0_18 = arith.constant 0 : index
    %c0_19 = arith.constant 0 : index
    %38 = vector.load %arg6[%c0_17, %c1, %c0_18, %c0_19] : memref<1x8x8x8xf32, #tpu.memory_space<vmem>>, vector<1x1x8x8xf32>
    %39 = vector.shape_cast %38 : vector<1x1x8x8xf32> to vector<8x8xf32>
    %40 = vector.shape_cast %37 : vector<8x8xf32> to vector<1x1x8x8xf32>
    tpu.vector_store %arg6[%c0_17, %c1, %c0_18, %c0_19], %40 {strides = array<i32>} : memref<1x8x8x8xf32, #tpu.memory_space<vmem>>, vector<1x1x8x8xf32>,
    %cst_20 = arith.constant dense<0.000000e+00> : vector<8x4xf32>
    %41 = tpu.matmul %37, %27, %cst_20 {dimension_numbers = #tpu.dot_dimension_numbers<[1], [0], [0], [1], [0, 0, 1, 1], [], []>} : vector<8x8xf32>, vector<8x4xf32>, vector<8x4xf32> -> vector<8x4xf32>
    %42 = vector.extract_strided_slice %3 {offsets = [0, 8], sizes = [8, 4], strides = [1, 1]} : vector<8x96xf32> to vector<8x4xf32>
    %cst_21 = arith.constant 5.000000e-01 : f32
    %43 = vector.broadcast %cst_21 : f32 to vector<8x4xf32>
    %44 = arith.mulf %42, %43 : vector<8x4xf32>
    %45 = vector.extract_strided_slice %3 {offsets = [0, 40], sizes = [8, 4], strides = [1, 1]} : vector<8x96xf32> to vector<8x4xf32>
    %46 = vector.extract_strided_slice %3 {offsets = [0, 72], sizes = [8, 4], strides = [1, 1]} : vector<8x96xf32> to vector<8x4xf32>
    %cst_22 = arith.constant dense<0.000000e+00> : vector<8x8xf32>
    %47 = tpu.matmul %44, %45, %cst_22 {dimension_numbers = #tpu.dot_dimension_numbers<[1], [1], [0], [0], [0, 0, 1, 0], [], []>} : vector<8x4xf32>, vector<8x4xf32>, vector<8x8xf32> -> vector<8x8xf32>
    %cst_23 = arith.constant dense<0xFF800000> : vector<8xf32>
    %48 = vector.multi_reduction <maximumf>, %47, %cst_23 [1] : vector<8x8xf32> to vector<8xf32>
    %49 = vector.shape_cast %48 : vector<8xf32> to vector<8x1xf32>
    %50 = vector.broadcast %49 : vector<8x1xf32> to vector<8x8xf32>
    %51 = arith.subf %47, %50 : vector<8x8xf32>
    %52 = math.exp %51 : vector<8x8xf32>
    %cst_24 = arith.constant dense<0.000000e+00> : vector<8xf32>
    %53 = vector.multi_reduction <add>, %52, %cst_24 [1] : vector<8x8xf32> to vector<8xf32>
    %54 = vector.shape_cast %53 : vector<8xf32> to vector<8x1xf32>
    %55 = vector.broadcast %54 : vector<8x1xf32> to vector<8x8xf32>
    %56 = arith.divf %52, %55 : vector<8x8xf32>
    %c0_25 = arith.constant 0 : index
    %c2 = arith.constant 2 : index
    %c0_26 = arith.constant 0 : index
    %c0_27 = arith.constant 0 : index
    %57 = vector.load %arg6[%c0_25, %c2, %c0_26, %c0_27] : memref<1x8x8x8xf32, #tpu.memory_space<vmem>>, vector<1x1x8x8xf32>
    %58 = vector.shape_cast %57 : vector<1x1x8x8xf32> to vector<8x8xf32>
    %59 = vector.shape_cast %56 : vector<8x8xf32> to vector<1x1x8x8xf32>
    tpu.vector_store %arg6[%c0_25, %c2, %c0_26, %c0_27], %59 {strides = array<i32>} : memref<1x8x8x8xf32, #tpu.memory_space<vmem>>, vector<1x1x8x8xf32>,
    %cst_28 = arith.constant dense<0.000000e+00> : vector<8x4xf32>
    %60 = tpu.matmul %56, %46, %cst_28 {dimension_numbers = #tpu.dot_dimension_numbers<[1], [0], [0], [1], [0, 0, 1, 1], [], []>} : vector<8x8xf32>, vector<8x4xf32>, vector<8x4xf32> -> vector<8x4xf32>
    %61 = vector.extract_strided_slice %3 {offsets = [0, 12], sizes = [8, 4], strides = [1, 1]} : vector<8x96xf32> to vector<8x4xf32>
    %cst_29 = arith.constant 5.000000e-01 : f32
    %62 = vector.broadcast %cst_29 : f32 to vector<8x4xf32>
    %63 = arith.mulf %61, %62 : vector<8x4xf32>
    %64 = vector.extract_strided_slice %3 {offsets = [0, 44], sizes = [8, 4], strides = [1, 1]} : vector<8x96xf32> to vector<8x4xf32>
    %65 = vector.extract_strided_slice %3 {offsets = [0, 76], sizes = [8, 4], strides = [1, 1]} : vector<8x96xf32> to vector<8x4xf32>
    %cst_30 = arith.constant dense<0.000000e+00> : vector<8x8xf32>
    %66 = tpu.matmul %63, %64, %cst_30 {dimension_numbers = #tpu.dot_dimension_numbers<[1], [1], [0], [0], [0, 0, 1, 0], [], []>} : vector<8x4xf32>, vector<8x4xf32>, vector<8x8xf32> -> vector<8x8xf32>
    %cst_31 = arith.constant dense<0xFF800000> : vector<8xf32>
    %67 = vector.multi_reduction <maximumf>, %66, %cst_31 [1] : vector<8x8xf32> to vector<8xf32>
    %68 = vector.shape_cast %67 : vector<8xf32> to vector<8x1xf32>
    %69 = vector.broadcast %68 : vector<8x1xf32> to vector<8x8xf32>
    %70 = arith.subf %66, %69 : vector<8x8xf32>
    %71 = math.exp %70 : vector<8x8xf32>
    %cst_32 = arith.constant dense<0.000000e+00> : vector<8xf32>
    %72 = vector.multi_reduction <add>, %71, %cst_32 [1] : vector<8x8xf32> to vector<8xf32>
    %73 = vector.shape_cast %72 : vector<8xf32> to vector<8x1xf32>
    %74 = vector.broadcast %73 : vector<8x1xf32> to vector<8x8xf32>
    %75 = arith.divf %71, %74 : vector<8x8xf32>
    %c0_33 = arith.constant 0 : index
    %c3 = arith.constant 3 : index
    %c0_34 = arith.constant 0 : index
    %c0_35 = arith.constant 0 : index
    %76 = vector.load %arg6[%c0_33, %c3, %c0_34, %c0_35] : memref<1x8x8x8xf32, #tpu.memory_space<vmem>>, vector<1x1x8x8xf32>
    %77 = vector.shape_cast %76 : vector<1x1x8x8xf32> to vector<8x8xf32>
    %78 = vector.shape_cast %75 : vector<8x8xf32> to vector<1x1x8x8xf32>
    tpu.vector_store %arg6[%c0_33, %c3, %c0_34, %c0_35], %78 {strides = array<i32>} : memref<1x8x8x8xf32, #tpu.memory_space<vmem>>, vector<1x1x8x8xf32>,
    %cst_36 = arith.constant dense<0.000000e+00> : vector<8x4xf32>
    %79 = tpu.matmul %75, %65, %cst_36 {dimension_numbers = #tpu.dot_dimension_numbers<[1], [0], [0], [1], [0, 0, 1, 1], [], []>} : vector<8x8xf32>, vector<8x4xf32>, vector<8x4xf32> -> vector<8x4xf32>
    %80 = vector.extract_strided_slice %3 {offsets = [0, 16], sizes = [8, 4], strides = [1, 1]} : vector<8x96xf32> to vector<8x4xf32>
    %cst_37 = arith.constant 5.000000e-01 : f32
    %81 = vector.broadcast %cst_37 : f32 to vector<8x4xf32>
    %82 = arith.mulf %80, %81 : vector<8x4xf32>
    %83 = vector.extract_strided_slice %3 {offsets = [0, 48], sizes = [8, 4], strides = [1, 1]} : vector<8x96xf32> to vector<8x4xf32>
    %84 = vector.extract_strided_slice %3 {offsets = [0, 80], sizes = [8, 4], strides = [1, 1]} : vector<8x96xf32> to vector<8x4xf32>
    %cst_38 = arith.constant dense<0.000000e+00> : vector<8x8xf32>
    %85 = tpu.matmul %82, %83, %cst_38 {dimension_numbers = #tpu.dot_dimension_numbers<[1], [1], [0], [0], [0, 0, 1, 0], [], []>} : vector<8x4xf32>, vector<8x4xf32>, vector<8x8xf32> -> vector<8x8xf32>
    %cst_39 = arith.constant dense<0xFF800000> : vector<8xf32>
    %86 = vector.multi_reduction <maximumf>, %85, %cst_39 [1] : vector<8x8xf32> to vector<8xf32>
    %87 = vector.shape_cast %86 : vector<8xf32> to vector<8x1xf32>
    %88 = vector.broadcast %87 : vector<8x1xf32> to vector<8x8xf32>
    %89 = arith.subf %85, %88 : vector<8x8xf32>
    %90 = math.exp %89 : vector<8x8xf32>
    %cst_40 = arith.constant dense<0.000000e+00> : vector<8xf32>
    %91 = vector.multi_reduction <add>, %90, %cst_40 [1] : vector<8x8xf32> to vector<8xf32>
    %92 = vector.shape_cast %91 : vector<8xf32> to vector<8x1xf32>
    %93 = vector.broadcast %92 : vector<8x1xf32> to vector<8x8xf32>
    %94 = arith.divf %90, %93 : vector<8x8xf32>
    %c0_41 = arith.constant 0 : index
    %c4 = arith.constant 4 : index
    %c0_42 = arith.constant 0 : index
    %c0_43 = arith.constant 0 : index
    %95 = vector.load %arg6[%c0_41, %c4, %c0_42, %c0_43] : memref<1x8x8x8xf32, #tpu.memory_space<vmem>>, vector<1x1x8x8xf32>
    %96 = vector.shape_cast %95 : vector<1x1x8x8xf32> to vector<8x8xf32>
    %97 = vector.shape_cast %94 : vector<8x8xf32> to vector<1x1x8x8xf32>
    tpu.vector_store %arg6[%c0_41, %c4, %c0_42, %c0_43], %97 {strides = array<i32>} : memref<1x8x8x8xf32, #tpu.memory_space<vmem>>, vector<1x1x8x8xf32>,
    %cst_44 = arith.constant dense<0.000000e+00> : vector<8x4xf32>
    %98 = tpu.matmul %94, %84, %cst_44 {dimension_numbers = #tpu.dot_dimension_numbers<[1], [0], [0], [1], [0, 0, 1, 1], [], []>} : vector<8x8xf32>, vector<8x4xf32>, vector<8x4xf32> -> vector<8x4xf32>
    %99 = vector.extract_strided_slice %3 {offsets = [0, 20], sizes = [8, 4], strides = [1, 1]} : vector<8x96xf32> to vector<8x4xf32>
    %cst_45 = arith.constant 5.000000e-01 : f32
    %100 = vector.broadcast %cst_45 : f32 to vector<8x4xf32>
    %101 = arith.mulf %99, %100 : vector<8x4xf32>
    %102 = vector.extract_strided_slice %3 {offsets = [0, 52], sizes = [8, 4], strides = [1, 1]} : vector<8x96xf32> to vector<8x4xf32>
    %103 = vector.extract_strided_slice %3 {offsets = [0, 84], sizes = [8, 4], strides = [1, 1]} : vector<8x96xf32> to vector<8x4xf32>
    %cst_46 = arith.constant dense<0.000000e+00> : vector<8x8xf32>
    %104 = tpu.matmul %101, %102, %cst_46 {dimension_numbers = #tpu.dot_dimension_numbers<[1], [1], [0], [0], [0, 0, 1, 0], [], []>} : vector<8x4xf32>, vector<8x4xf32>, vector<8x8xf32> -> vector<8x8xf32>
    %cst_47 = arith.constant dense<0xFF800000> : vector<8xf32>
    %105 = vector.multi_reduction <maximumf>, %104, %cst_47 [1] : vector<8x8xf32> to vector<8xf32>
    %106 = vector.shape_cast %105 : vector<8xf32> to vector<8x1xf32>
    %107 = vector.broadcast %106 : vector<8x1xf32> to vector<8x8xf32>
    %108 = arith.subf %104, %107 : vector<8x8xf32>
    %109 = math.exp %108 : vector<8x8xf32>
    %cst_48 = arith.constant dense<0.000000e+00> : vector<8xf32>
    %110 = vector.multi_reduction <add>, %109, %cst_48 [1] : vector<8x8xf32> to vector<8xf32>
    %111 = vector.shape_cast %110 : vector<8xf32> to vector<8x1xf32>
    %112 = vector.broadcast %111 : vector<8x1xf32> to vector<8x8xf32>
    %113 = arith.divf %109, %112 : vector<8x8xf32>
    %c0_49 = arith.constant 0 : index
    %c5 = arith.constant 5 : index
    %c0_50 = arith.constant 0 : index
    %c0_51 = arith.constant 0 : index
    %114 = vector.load %arg6[%c0_49, %c5, %c0_50, %c0_51] : memref<1x8x8x8xf32, #tpu.memory_space<vmem>>, vector<1x1x8x8xf32>
    %115 = vector.shape_cast %114 : vector<1x1x8x8xf32> to vector<8x8xf32>
    %116 = vector.shape_cast %113 : vector<8x8xf32> to vector<1x1x8x8xf32>
    tpu.vector_store %arg6[%c0_49, %c5, %c0_50, %c0_51], %116 {strides = array<i32>} : memref<1x8x8x8xf32, #tpu.memory_space<vmem>>, vector<1x1x8x8xf32>,
    %cst_52 = arith.constant dense<0.000000e+00> : vector<8x4xf32>
    %117 = tpu.matmul %113, %103, %cst_52 {dimension_numbers = #tpu.dot_dimension_numbers<[1], [0], [0], [1], [0, 0, 1, 1], [], []>} : vector<8x8xf32>, vector<8x4xf32>, vector<8x4xf32> -> vector<8x4xf32>
    %118 = vector.extract_strided_slice %3 {offsets = [0, 24], sizes = [8, 4], strides = [1, 1]} : vector<8x96xf32> to vector<8x4xf32>
    %cst_53 = arith.constant 5.000000e-01 : f32
    %119 = vector.broadcast %cst_53 : f32 to vector<8x4xf32>
    %120 = arith.mulf %118, %119 : vector<8x4xf32>
    %121 = vector.extract_strided_slice %3 {offsets = [0, 56], sizes = [8, 4], strides = [1, 1]} : vector<8x96xf32> to vector<8x4xf32>
    %122 = vector.extract_strided_slice %3 {offsets = [0, 88], sizes = [8, 4], strides = [1, 1]} : vector<8x96xf32> to vector<8x4xf32>
    %cst_54 = arith.constant dense<0.000000e+00> : vector<8x8xf32>
    %123 = tpu.matmul %120, %121, %cst_54 {dimension_numbers = #tpu.dot_dimension_numbers<[1], [1], [0], [0], [0, 0, 1, 0], [], []>} : vector<8x4xf32>, vector<8x4xf32>, vector<8x8xf32> -> vector<8x8xf32>
    %cst_55 = arith.constant dense<0xFF800000> : vector<8xf32>
    %124 = vector.multi_reduction <maximumf>, %123, %cst_55 [1] : vector<8x8xf32> to vector<8xf32>
    %125 = vector.shape_cast %124 : vector<8xf32> to vector<8x1xf32>
    %126 = vector.broadcast %125 : vector<8x1xf32> to vector<8x8xf32>
    %127 = arith.subf %123, %126 : vector<8x8xf32>
    %128 = math.exp %127 : vector<8x8xf32>
    %cst_56 = arith.constant dense<0.000000e+00> : vector<8xf32>
    %129 = vector.multi_reduction <add>, %128, %cst_56 [1] : vector<8x8xf32> to vector<8xf32>
    %130 = vector.shape_cast %129 : vector<8xf32> to vector<8x1xf32>
    %131 = vector.broadcast %130 : vector<8x1xf32> to vector<8x8xf32>
    %132 = arith.divf %128, %131 : vector<8x8xf32>
    %c0_57 = arith.constant 0 : index
    %c6 = arith.constant 6 : index
    %c0_58 = arith.constant 0 : index
    %c0_59 = arith.constant 0 : index
    %133 = vector.load %arg6[%c0_57, %c6, %c0_58, %c0_59] : memref<1x8x8x8xf32, #tpu.memory_space<vmem>>, vector<1x1x8x8xf32>
    %134 = vector.shape_cast %133 : vector<1x1x8x8xf32> to vector<8x8xf32>
    %135 = vector.shape_cast %132 : vector<8x8xf32> to vector<1x1x8x8xf32>
    tpu.vector_store %arg6[%c0_57, %c6, %c0_58, %c0_59], %135 {strides = array<i32>} : memref<1x8x8x8xf32, #tpu.memory_space<vmem>>, vector<1x1x8x8xf32>,
    %cst_60 = arith.constant dense<0.000000e+00> : vector<8x4xf32>
    %136 = tpu.matmul %132, %122, %cst_60 {dimension_numbers = #tpu.dot_dimension_numbers<[1], [0], [0], [1], [0, 0, 1, 1], [], []>} : vector<8x8xf32>, vector<8x4xf32>, vector<8x4xf32> -> vector<8x4xf32>
    %137 = vector.extract_strided_slice %3 {offsets = [0, 28], sizes = [8, 4], strides = [1, 1]} : vector<8x96xf32> to vector<8x4xf32>
    %cst_61 = arith.constant 5.000000e-01 : f32
    %138 = vector.broadcast %cst_61 : f32 to vector<8x4xf32>
    %139 = arith.mulf %137, %138 : vector<8x4xf32>
    %140 = vector.extract_strided_slice %3 {offsets = [0, 60], sizes = [8, 4], strides = [1, 1]} : vector<8x96xf32> to vector<8x4xf32>
    %141 = vector.extract_strided_slice %3 {offsets = [0, 92], sizes = [8, 4], strides = [1, 1]} : vector<8x96xf32> to vector<8x4xf32>
    %cst_62 = arith.constant dense<0.000000e+00> : vector<8x8xf32>
    %142 = tpu.matmul %139, %140, %cst_62 {dimension_numbers = #tpu.dot_dimension_numbers<[1], [1], [0], [0], [0, 0, 1, 0], [], []>} : vector<8x4xf32>, vector<8x4xf32>, vector<8x8xf32> -> vector<8x8xf32>
    %cst_63 = arith.constant dense<0xFF800000> : vector<8xf32>
    %143 = vector.multi_reduction <maximumf>, %142, %cst_63 [1] : vector<8x8xf32> to vector<8xf32>
    %144 = vector.shape_cast %143 : vector<8xf32> to vector<8x1xf32>
    %145 = vector.broadcast %144 : vector<8x1xf32> to vector<8x8xf32>
    %146 = arith.subf %142, %145 : vector<8x8xf32>
    %147 = math.exp %146 : vector<8x8xf32>
    %cst_64 = arith.constant dense<0.000000e+00> : vector<8xf32>
    %148 = vector.multi_reduction <add>, %147, %cst_64 [1] : vector<8x8xf32> to vector<8xf32>
    %149 = vector.shape_cast %148 : vector<8xf32> to vector<8x1xf32>
    %150 = vector.broadcast %149 : vector<8x1xf32> to vector<8x8xf32>
    %151 = arith.divf %147, %150 : vector<8x8xf32>
    %c0_65 = arith.constant 0 : index
    %c7 = arith.constant 7 : index
    %c0_66 = arith.constant 0 : index
    %c0_67 = arith.constant 0 : index
    %152 = vector.load %arg6[%c0_65, %c7, %c0_66, %c0_67] : memref<1x8x8x8xf32, #tpu.memory_space<vmem>>, vector<1x1x8x8xf32>
    %153 = vector.shape_cast %152 : vector<1x1x8x8xf32> to vector<8x8xf32>
    %154 = vector.shape_cast %151 : vector<8x8xf32> to vector<1x1x8x8xf32>
    tpu.vector_store %arg6[%c0_65, %c7, %c0_66, %c0_67], %154 {strides = array<i32>} : memref<1x8x8x8xf32, #tpu.memory_space<vmem>>, vector<1x1x8x8xf32>,
    %cst_68 = arith.constant dense<0.000000e+00> : vector<8x4xf32>
    %155 = tpu.matmul %151, %141, %cst_68 {dimension_numbers = #tpu.dot_dimension_numbers<[1], [0], [0], [1], [0, 0, 1, 1], [], []>} : vector<8x8xf32>, vector<8x4xf32>, vector<8x4xf32> -> vector<8x4xf32>
    %156 = tpu.concatenate %22, %41, %60, %79, %98, %117, %136, %155 in 1 : vector<8x4xf32>, vector<8x4xf32>, vector<8x4xf32>, vector<8x4xf32>, vector<8x4xf32>, vector<8x4xf32>, vector<8x4xf32>, vector<8x4xf32> -> vector<8x32xf32>
    %c0_69 = arith.constant 0 : index
    %c0_70 = arith.constant 0 : index
    %157 = vector.load %arg3[%c0_69, %c0_70] : memref<32x32xf32, #tpu.memory_space<vmem>>, vector<32x32xf32>
    %cst_71 = arith.constant dense<0.000000e+00> : vector<8x32xf32>
    %158 = tpu.matmul %156, %157, %cst_71 {dimension_numbers = #tpu.dot_dimension_numbers<[1], [0], [0], [1], [0, 0, 1, 1], [], []>} : vector<8x32xf32>, vector<32x32xf32>, vector<8x32xf32> -> vector<8x32xf32>
    %c0_72 = arith.constant 0 : index
    %c0_73 = arith.constant 0 : index
    %159 = vector.load %arg4[%c0_72, %c0_73] : memref<1x32xf32, #tpu.memory_space<vmem>>, vector<1x32xf32>
    %160 = vector.broadcast %159 : vector<1x32xf32> to vector<8x32xf32>
    %161 = arith.addf %158, %160 : vector<8x32xf32>
    %c0_74 = arith.constant 0 : index
    %c0_75 = arith.constant 0 : index
    %c0_76 = arith.constant 0 : index
    %162 = vector.load %arg5[%c0_74, %c0_75, %c0_76] : memref<1x8x32xf32, #tpu.memory_space<vmem>>, vector<1x8x32xf32>
    %163 = vector.shape_cast %162 : vector<1x8x32xf32> to vector<8x32xf32>
    %164 = vector.shape_cast %161 : vector<8x32xf32> to vector<1x8x32xf32>
    tpu.vector_store %arg5[%c0_74, %c0_75, %c0_76], %164 {strides = array<i32>} : memref<1x8x32xf32, #tpu.memory_space<vmem>>, vector<1x8x32xf32>,
    return
  }
  func.func @transform_0(%arg0: i32) -> (i32, i32, i32) {
    %c0_i32 = arith.constant 0 : i32
    %c0_i32_0 = arith.constant 0 : i32
    %c0_i32_1 = arith.constant 0 : i32
    return %arg0, %c0_i32, %c0_i32_0 : i32, i32, i32
  }
  func.func @transform_1(%arg0: i32) -> (i32, i32) {
    %c0_i32 = arith.constant 0 : i32
    %c0_i32_0 = arith.constant 0 : i32
    %c0_i32_1 = arith.constant 0 : i32
    return %c0_i32, %c0_i32_0 : i32, i32
  }
  func.func @transform_2(%arg0: i32) -> (i32, i32) {
    %c0_i32 = arith.constant 0 : i32
    %c0_i32_0 = arith.constant 0 : i32
    %c0_i32_1 = arith.constant 0 : i32
    return %c0_i32, %c0_i32_0 : i32, i32
  }
  func.func @transform_3(%arg0: i32) -> (i32, i32) {
    %c0_i32 = arith.constant 0 : i32
    %c0_i32_0 = arith.constant 0 : i32
    %c0_i32_1 = arith.constant 0 : i32
    return %c0_i32, %c0_i32_0 : i32, i32
  }
  func.func @transform_4(%arg0: i32) -> (i32, i32, i32) {
    %c0_i32 = arith.constant 0 : i32
    %c0_i32_0 = arith.constant 0 : i32
    %c0_i32_1 = arith.constant 0 : i32
    return %arg0, %c0_i32, %c0_i32_0 : i32, i32, i32
  }
  func.func @transform_5(%arg0: i32) -> (i32, i32, i32, i32) {
    %c0_i32 = arith.constant 0 : i32
    %c0_i32_0 = arith.constant 0 : i32
    %c0_i32_1 = arith.constant 0 : i32
    %c0_i32_2 = arith.constant 0 : i32
    return %arg0, %c0_i32, %c0_i32_0, %c0_i32_1 : i32, i32, i32, i32
  }
}

</mosaic_0001>

<llo_original>
// kernel: tpu_custom_call.1
$region0: #{tpu_custom_call.1}
  #allocation0 [shape = 'u32[]', space=smem, size = 0x4, offset = 0x4, fixed_abs, tag = 'smem constant byte address 0x4 - core index']
  #allocation1 [shape = 'u32[144,128]{1,0:T(1,128)}', space=vmem, size = 0x12000, scoped, tag = 'internal scratch']
  %s0 = inlined_call_operand.hbm [shape: f32[2,8,32], index: 0, kind: input, shape index: {}]
  %s1 = inlined_call_operand.hbm [shape: f32[32,96], index: 1, kind: input, shape index: {}]
  %s2 = inlined_call_operand.hbm [shape: f32[32,32], index: 2, kind: input, shape index: {}]
  %s3 = inlined_call_operand.vmem [shape: f32[1,32], index: 3, kind: input, shape index: {}]
  %s4 = inlined_call_operand.hbm [shape: f32[2,8,32], index: 4, kind: output, shape index: {0}]
  %s5 = inlined_call_operand.hbm [shape: f32[2,8,8,8], index: 5, kind: output, shape index: {1}]
  %6 = xla_tuple %s4, %s5
  %s7 = sld [smem:[#allocation0]]
  $region69: #{tpu_custom_call.1} parent=0
    _
  %s9 = ssub.s32 1, %s7
  %s10 = scalar_select 0, %s9, %s7
  $region1: #{tpu_custom_call.1} parent=0
    #allocation2 [shape = 'u8[8192]{0}', space=vmem, size = 0x2000, scoped, tag = 'input window, operand 0']
    #allocation3 [shape = 's32[2]{0}', space=sflag, size = 0x8, scoped, tag = 'scoped memory for tpu_custom_call.1']
    #allocation4 [shape = 's32[2]{0}', space=sflag, size = 0x8, scoped, tag = 'scoped memory for tpu_custom_call.1']
    #allocation5 [shape = 'u8[16384]{0}', space=vmem, size = 0x4000, scoped, tag = 'input window, operand 1, single buffered']
    #allocation6 [shape = 's32[1]{0}', space=sflag, size = 0x4, scoped, tag = 'scoped memory for tpu_custom_call.1']
    #allocation7 [shape = 'u8[16384]{0}', space=vmem, size = 0x4000, scoped, tag = 'input window, operand 2, single buffered']
    #allocation8 [shape = 'u8[8192]{0}', space=vmem, size = 0x2000, scoped, tag = 'output window, operand 0']
    #allocation9 [shape = 'u8[65536]{0}', space=vmem, size = 0x10000, scoped, tag = 'output window, operand 1']
    #allocation10 [shape = 's32[2]{0}', space=sflag, size = 0x8, scoped, tag = 'scoped memory for tpu_custom_call.1']
    %11 = vsyncpa [#allocation3], 0
    %s12 = scalar_lea.sflag [#allocation3], 1
    %13 = vsyncpa %s12, 0
    %14 = vsyncpa [#allocation6], 0
    %15 = vsyncpa [#allocation4], 0
    %s16 = scalar_lea.sflag [#allocation4], 1
    %17 = vsyncpa %s16, 0
    %18 = vsyncpa [#allocation10], 0
    %s19 = scalar_lea.sflag [#allocation10], 1
    %20 = vsyncpa %s19, 0
    loop: start=0, step=1, limit=4
    $region2: #{tpu_custom_call.1} parent=1 // loop_pre_header
      _
    $region3: #{tpu_custom_call.1} parent=1 // loop_header
      %s22 = sphi 0, %s26
      %p23 = scmp.ge.s32.totalorder %s22, 4
      %s32 = sphi 0, %s34
      %s35 = sphi 0, %s32
      %s36 = sphi 0, %s35
      %s52 = sphi 0, %s36
      %s56 = sphi 0, %s56
      %s58 = sphi 0, %s56
      %s59 = sphi 0, %s58
      %s73 = sphi 0, %s59
      %s77 = sphi 0, %s77
      %s79 = sphi 0, %s77
      %s80 = sphi 0, %s79
      %s94 = sphi 0, %s80
      %s98 = sphi 0, %s98
      %s100 = sphi 0, %s98
      %s101 = sphi 0, %s100
      %s115 = sphi 0, %s101
      %s121 = sphi 0, %s123
      %s124 = sphi 0, %s121
      %s125 = sphi 0, %s124
      %s141 = sphi 0, %s125
      %s147 = sphi 0, %s149
      %s150 = sphi 0, %s147
      %s151 = sphi 0, %s150
      %s167 = sphi 0, %s151
    $region4: #{tpu_custom_call.1} parent=1 // loop_header_branch
      %25 = sbr.rel (%p23) target = $region8
    $region5: #{tpu_custom_call.1} parent=1 // loop_body
      %s27 = ssub.s32 %s22, 1
      %s28 = ssub.s32 %s22, 2
      %s29 = sadd.s32 %s22, 1
      %s30 = ssub.s32 %s22, %s29
      %p31 = scmp.eq.s32.totalorder %s30, 0
      %s33 = sadd.s32 %s32, 1
      %s34 = scalar_select %p31, %s32, %s33
      %p37 = pneg %p31
      %p38 = scmp.eq.s32.totalorder %s22, 1
      %p39 = por %p37, %p38
      %p40 = scmp.ne.s32.totalorder %s32, %s35
      %p41 = scmp.eq.s32.totalorder %s22, 0
      %p42 = por %p40, %p41
      %p43 = scmp.ne.s32.totalorder %s32, %s35
      %p44 = scmp.eq.s32.totalorder %s27, 1
      %p45 = por %p43, %p44
      %p46 = scmp.ne.s32.totalorder %s35, %s36
      %p47 = scmp.eq.s32.totalorder %s27, 0
      %p48 = por %p46, %p47
      %p49 = scmp.ne.s32.totalorder %s35, %s36
      %p50 = scmp.eq.s32.totalorder %s28, 1
      %p51 = por %p49, %p50
      %p53 = scmp.ne.s32.totalorder %s36, %s52
      %p54 = scmp.eq.s32.totalorder %s28, 0
      %p55 = por %p53, %p54
      %s57 = sadd.s32 %s56, 1
      %p60 = scmp.eq.s32.totalorder %s22, 1
      %p61 = scmp.ne.s32.totalorder %s56, %s58
      %p62 = scmp.eq.s32.totalorder %s22, 0
      %p63 = por %p61, %p62
      %p64 = scmp.ne.s32.totalorder %s56, %s58
      %p65 = scmp.eq.s32.totalorder %s27, 1
      %p66 = por %p64, %p65
      %p67 = scmp.ne.s32.totalorder %s58, %s59
      %p68 = scmp.eq.s32.totalorder %s27, 0
      %p69 = por %p67, %p68
      %p70 = scmp.ne.s32.totalorder %s58, %s59
      %p71 = scmp.eq.s32.totalorder %s28, 1
      %p72 = por %p70, %p71
      %p74 = scmp.ne.s32.totalorder %s59, %s73
      %p75 = scmp.eq.s32.totalorder %s28, 0
      %p76 = por %p74, %p75
      %s78 = sadd.s32 %s77, 1
      %p81 = scmp.eq.s32.totalorder %s22, 1
      %p82 = scmp.ne.s32.totalorder %s77, %s79
      %p83 = scmp.eq.s32.totalorder %s22, 0
      %p84 = por %p82, %p83
      %p85 = scmp.ne.s32.totalorder %s77, %s79
      %p86 = scmp.eq.s32.totalorder %s27, 1
      %p87 = por %p85, %p86
      %p88 = scmp.ne.s32.totalorder %s79, %s80
      %p89 = scmp.eq.s32.totalorder %s27, 0
      %p90 = por %p88, %p89
      %p91 = scmp.ne.s32.totalorder %s79, %s80
      %p92 = scmp.eq.s32.totalorder %s28, 1
      %p93 = por %p91, %p92
      %p95 = scmp.ne.s32.totalorder %s80, %s94
      %p96 = scmp.eq.s32.totalorder %s28, 0
      %p97 = por %p95, %p96
      %s99 = sadd.s32 %s98, 1
      %p102 = scmp.eq.s32.totalorder %s22, 1
      %p103 = scmp.ne.s32.totalorder %s98, %s100
      %p104 = scmp.eq.s32.totalorder %s22, 0
      %p105 = por %p103, %p104
      %p106 = scmp.ne.s32.totalorder %s98, %s100
      %p107 = scmp.eq.s32.totalorder %s27, 1
      %p108 = por %p106, %p107
      %p109 = scmp.ne.s32.totalorder %s100, %s101
      %p110 = scmp.eq.s32.totalorder %s27, 0
      %p111 = por %p109, %p110
      %p112 = scmp.ne.s32.totalorder %s100, %s101
      %p113 = scmp.eq.s32.totalorder %s28, 1
      %p114 = por %p112, %p113
      %p116 = scmp.ne.s32.totalorder %s101, %s115
      %p117 = scmp.eq.s32.totalorder %s28, 0
      %p118 = por %p116, %p117
      %s119 = ssub.s32 %s22, %s29
      %p120 = scmp.eq.s32.totalorder %s119, 0
      %s122 = sadd.s32 %s121, 1
      %s123 = scalar_select %p120, %s121, %s122
      %p126 = pneg %p120
      %p127 = scmp.eq.s32.totalorder %s22, 1
      %p128 = por %p126, %p127
      %p129 = scmp.ne.s32.totalorder %s121, %s124
      %p130 = scmp.eq.s32.totalorder %s22, 0
      %p131 = por %p129, %p130
      %p132 = scmp.ne.s32.totalorder %s121, %s124
      %p133 = scmp.eq.s32.totalorder %s27, 1
      %p134 = por %p132, %p133
      %p135 = scmp.ne.s32.totalorder %s124, %s125
      %p136 = scmp.eq.s32.totalorder %s27, 0
      %p137 = por %p135, %p136
      %p138 = scmp.ne.s32.totalorder %s124, %s125
      %p139 = scmp.eq.s32.totalorder %s28, 1
      %p140 = por %p138, %p139
      %p142 = scmp.ne.s32.totalorder %s125, %s141
      %p143 = scmp.eq.s32.totalorder %s28, 0
      %p144 = por %p142, %p143
      %s145 = ssub.s32 %s22, %s29
      %p146 = scmp.eq.s32.totalorder %s145, 0
      %s148 = sadd.s32 %s147, 1
      %s149 = scalar_select %p146, %s147, %s148
      %p152 = pneg %p146
      %p153 = scmp.eq.s32.totalorder %s22, 1
      %p154 = por %p152, %p153
      %p155 = scmp.ne.s32.totalorder %s147, %s150
      %p156 = scmp.eq.s32.totalorder %s22, 0
      %p157 = por %p155, %p156
      %p158 = scmp.ne.s32.totalorder %s147, %s150
      %p159 = scmp.eq.s32.totalorder %s27, 1
      %p160 = por %p158, %p159
      %p161 = scmp.ne.s32.totalorder %s150, %s151
      %p162 = scmp.eq.s32.totalorder %s27, 0
      %p163 = por %p161, %p162
      %p164 = scmp.ne.s32.totalorder %s150, %s151
      %p165 = scmp.eq.s32.totalorder %s28, 1
      %p166 = por %p164, %p165
      %p168 = scmp.ne.s32.totalorder %s151, %s167
      %p169 = scmp.eq.s32.totalorder %s28, 0
      %p170 = por %p168, %p169
      %p171 = scmp.le.s32.totalorder 1, %s22
      %p172 = scmp.lt.s32.totalorder %s22, 3
      %p173 = pnand %p171, %p172
      %p174 = pneg %p173
      // Predicated region
      $region9: #{tpu_custom_call.1} parent=5 // pred_check
        _
      $region10: #{tpu_custom_call.1} parent=5 // pred_check_branch
        %176 = sbr.rel (%p173) target = $region12
      $region11: #{tpu_custom_call.1} parent=5 // pred_region
        %s177 = ssub.s32 %s22, 1
        // Predicated region
        $region13: #{tpu_custom_call.1} parent=11 // pred_check
          %p178 = pneg %p69
        $region14: #{tpu_custom_call.1} parent=11 // pred_check_branch
          %180 = sbr.rel (%p178) target = $region16
        $region15: #{tpu_custom_call.1} parent=11 // pred_region
          %s182 = ssub.s32 512, 512
          %183 = vsyncadd [#allocation6], %s182
          %s184 = sshll.u32 [#allocation5], 4
          %s185 = int_to_ptr.vmem [resolvable:$true] %s184
          %190 = dma.hbm_to_vmem [thread:$0]  %s1, 512, %s185, [#allocation6], 128, 128, 8
        $region16: #{tpu_custom_call.1} parent=11 // pred_fallthru
          _
        // Predicated region
        $region17: #{tpu_custom_call.1} parent=11 // pred_check
          %p191 = pneg %p90
        $region18: #{tpu_custom_call.1} parent=11 // pred_check_branch
          %193 = sbr.rel (%p191) target = $region20
        $region19: #{tpu_custom_call.1} parent=11 // pred_region
          %s195 = ssub.s32 512, 512
          %196 = vsyncadd [#allocation6], %s195
          %s197 = sshll.u32 [#allocation7], 4
          %s198 = int_to_ptr.vmem [resolvable:$true] %s197
          %203 = dma.hbm_to_vmem [thread:$0]  %s2, 512, %s198, [#allocation6], 128, 128, 8
        $region20: #{tpu_custom_call.1} parent=11 // pred_fallthru
          _
        // Predicated region
        $region21: #{tpu_custom_call.1} parent=11 // pred_check
          %p204 = pneg %p111
        $region22: #{tpu_custom_call.1} parent=11 // pred_check_branch
          %206 = sbr.rel (%p204) target = $region24
        $region23: #{tpu_custom_call.1} parent=11 // pred_region
          _
        $region24: #{tpu_custom_call.1} parent=11 // pred_fallthru
          _
      $region12: #{tpu_custom_call.1} parent=5 // pred_fallthru
        _
      %p207 = scmp.lt.s32.totalorder %s22, 2
      // Predicated region
      $region25: #{tpu_custom_call.1} parent=5 // pred_check
        %p208 = pneg %p207
      $region26: #{tpu_custom_call.1} parent=5 // pred_check_branch
        %210 = sbr.rel (%p208) target = $region28
      $region27: #{tpu_custom_call.1} parent=5 // pred_region
        // Predicated region
        $region29: #{tpu_custom_call.1} parent=27 // pred_check
          %p211 = pneg %p42
        $region30: #{tpu_custom_call.1} parent=27 // pred_check_branch
          %213 = sbr.rel (%p211) target = $region32
        $region31: #{tpu_custom_call.1} parent=27 // pred_region
          %s214 = sand.u32 %s32, 1
          %s215 = scalar_lea.sflag [#allocation3], %s214
          %s216 = sand.u32 %s32, 1
          %s217 = smul.addr %s216, 8
          %s218 = scalar_lea.vmem [#allocation2], %s217
          %s220 = ssub.s32 128, 128
          %221 = vsyncadd %s215, %s220
          %s222 = smul.addr %s22, 128
          %s223 = scalar_lea.hbm %s0, %s222
          %s225 = sshll.u32 %s218, 4
          %s226 = int_to_ptr.vmem [resolvable:$true] %s225
          %228 = dma.hbm_to_vmem [thread:$0]  %s223, 128, %s226, %s215
        $region32: #{tpu_custom_call.1} parent=27 // pred_fallthru
          _
      $region28: #{tpu_custom_call.1} parent=5 // pred_fallthru
        _
      %p229 = scmp.le.s32.totalorder 1, %s22
      %p230 = scmp.lt.s32.totalorder %s22, 3
      %p231 = pnand %p229, %p230
      %p232 = pneg %p231
      // Predicated region
      $region33: #{tpu_custom_call.1} parent=5 // pred_check
        _
      $region34: #{tpu_custom_call.1} parent=5 // pred_check_branch
        %234 = sbr.rel (%p231) target = $region36
      $region35: #{tpu_custom_call.1} parent=5 // pred_region
        %s235 = ssub.s32 %s22, 1
        %s236 = sand.u32 %s35, 1
        %s237 = scalar_lea.sflag [#allocation3], %s236
        %s238 = sand.u32 %s35, 1
        %s239 = smul.addr %s238, 8
        %s240 = scalar_lea.vmem [#allocation2], %s239
        // Predicated region
        $region37: #{tpu_custom_call.1} parent=35 // pred_check
          %p241 = pneg %p48
        $region38: #{tpu_custom_call.1} parent=35 // pred_check_branch
          %243 = sbr.rel (%p241) target = $region40
        $region39: #{tpu_custom_call.1} parent=35 // pred_region
          %244 = dma.done %s237, 128
        $region40: #{tpu_custom_call.1} parent=35 // pred_fallthru
          _
        // Predicated region
        $region41: #{tpu_custom_call.1} parent=35 // pred_check
          %p245 = pneg %p69
        $region42: #{tpu_custom_call.1} parent=35 // pred_check_branch
          %247 = sbr.rel (%p245) target = $region44
        $region43: #{tpu_custom_call.1} parent=35 // pred_region
          %248 = dma.done [#allocation6], 512
        $region44: #{tpu_custom_call.1} parent=35 // pred_fallthru
          _
        // Predicated region
        $region45: #{tpu_custom_call.1} parent=35 // pred_check
          %p249 = pneg %p90
        $region46: #{tpu_custom_call.1} parent=35 // pred_check_branch
          %251 = sbr.rel (%p249) target = $region48
        $region47: #{tpu_custom_call.1} parent=35 // pred_region
          %252 = dma.done [#allocation6], 512
        $region48: #{tpu_custom_call.1} parent=35 // pred_fallthru
          _
        %s253 = sand.u32 %s35, 1
        %s254 = scalar_lea.sflag [#allocation3], %s253
        %s255 = sand.u32 %s35, 1
        %s256 = smul.addr %s255, 8
        %s257 = scalar_lea.vmem [#allocation2], %s256
        %p258 = pneg %p48
        %p259 = pneg %p45
        %p260 = pneg %p69
        %p261 = pneg %p66
        %p262 = pneg %p90
        %p263 = pneg %p87
        %p264 = pneg %p111
        %p265 = pneg %p108
        %p266 = pneg %p137
        %p267 = pneg %p134
        %s268 = sand.u32 %s124, 1
        %s269 = scalar_lea.sflag [#allocation4], %s268
        %s270 = sand.u32 %s124, 1
        %s271 = smul.addr %s270, 8
        %s272 = scalar_lea.vmem [#allocation8], %s271
        %p273 = pneg %p163
        %p274 = pneg %p160
        %s275 = sand.u32 %s150, 1
        %s276 = scalar_lea.sflag [#allocation10], %s275
        %s277 = sand.u32 %s150, 1
        %s278 = smul.addr %s277, 64
        %s279 = scalar_lea.vmem [#allocation9], %s278
        %v280 = vld [vmem:[%s240] sm:$0xff]
        %v281 = vld [vmem:[#allocation5] sm:$0xff]
        %v282 = vld [vmem:[#allocation5 + $0x8] sm:$0xff]
        %v283 = vld [vmem:[#allocation5 + $0x10] sm:$0xff]
        %v284 = vld [vmem:[#allocation5 + $0x18] sm:$0xff]
        %vm285 = vcmask 261120
        %v287 = vsel %vm285, %v280, 0
        %289 = vmatprep.subr.mxu0 0.0
        %290 = vmatpush1.msra.mxu0 %v281
        %291 = vmatprep.subr.mxu0 0.0
        %292 = vmatpush1.msra.mxu0 %v282
        %293 = vmatprep.subr.mxu0 0.0
        %294 = vmatpush1.msra.mxu0 %v283
        %295 = vmatprep.subr.mxu0 0.0
        %296 = vmatpush1.msra.mxu0 %v284
        %297 = vmatprep.subr.mxu0 0.0
        %298 = vmatpush1.msra.mxu0 0.0
        %299 = vmatprep.subr.mxu0 0.0
        %300 = vmatpush1.msra.mxu0 0.0
        %301 = vmatprep.subr.mxu0 0.0
        %302 = vmatpush1.msra.mxu0 0.0
        %303 = vmatprep.subr.mxu0 0.0
        %304 = vmatpush1.msra.mxu0 0.0
        %305 = vmatprep.subr.mxu0 0.0
        %306 = vmatpush1.msra.mxu0 0.0
        %307 = vmatprep.subr.mxu0 0.0
        %308 = vmatpush1.msra.mxu0 0.0
        %309 = vmatprep.subr.mxu0 0.0
        %310 = vmatpush1.msra.mxu0 0.0
        %311 = vmatprep.subr.mxu0 0.0
        %312 = vmatpush1.msra.mxu0 0.0
        %313 = vmatprep.subr.mxu0 0.0
        %314 = vmatpush1.msra.mxu0 0.0
        %315 = vmatprep.subr.mxu0 0.0
        %316 = vmatpush1.msra.mxu0 0.0
        %317 = vmatprep.subr.mxu0 0.0
        %318 = vmatpush1.msra.mxu0 0.0
        %319 = vmatprep.subr.mxu0 0.0
        %320 = vmatpush1.msra.mxu0 0.0
        %321 = vmatprep.subr.mxu0 0.0
        %322 = vmatpush1.msra.mxu0 0.0
        %323 = vmatprep.subr.mxu0 0.0
        %324 = vmatpush1.msra.mxu0 0.0
        %325 = vmatprep.subr.mxu0 0.0
        %326 = vmatpush1.msra.mxu0 0.0
        %327 = vmatprep.subr.mxu0 0.0
        %328 = vmatpush1.msra.mxu0 0.0
        %329 = vmatprep.subr.mxu0 0.0
        %330 = vmatpush1.msra.mxu0 0.0
        %331 = vmatprep.subr.mxu0 0.0
        %332 = vmatpush1.msra.mxu0 0.0
        %333 = vmatprep.subr.mxu0 0.0
        %334 = vmatpush1.msra.mxu0 0.0
        %335 = vmatprep.subr.mxu0 0.0
        %336 = vmatpush1.msra.mxu0 0.0
        %337 = vmatprep.subr.mxu0 0.0
        %338 = vmatpush1.msra.mxu0 0.0
        %339 = vmatprep.subr.mxu0 0.0
        %340 = vmatpush1.msra.mxu0 0.0
        %341 = vmatprep.subr.mxu0 0.0
        %342 = vmatpush1.msra.mxu0 0.0
        %343 = vmatprep.subr.mxu0 0.0
        %344 = vmatpush1.msra.mxu0 0.0
        %345 = vmatprep.subr.mxu0 0.0
        %346 = vmatpush1.msra.mxu0 0.0
        %347 = vmatprep.subr.mxu0 0.0
        %348 = vmatpush1.msra.mxu0 0.0
        %349 = vmatprep.subr.mxu0 0.0
        %350 = vmatpush1.msra.mxu0 0.0
        %351 = vmatprep.subr.mxu0 0.0
        %352 = vmatpush1.msra.mxu0 0.0
        %353 = vmatprep.mubr.f32.mxu0 0.0
        %354 = vmatmul.mubr.f32.gmra.mrb[0].mxu0 %v287
        %v355 = vpop.f32.mrb[0].mxu0
        %v356 = vadd.f32 0.0, %v355
        %v357 = vpop.f32.mrb[0].mxu0
        %358 = vdwg.mxu0
        %v359 = vmul.f32 %v356, 0.5
        %361 = vrot.lane.b32.xlu0 %v356, 96
        %v362 = vpop.permute.xlu0 %361
        %vm363 = vcmask 31744
        %v365 = vsel %vm363, %v359, 0
        %v367 = vsel %vm363, %v362, 0
        %369 = vmatprep.subr.mxu0 0.0
        %370 = vmatpush1.xpose.msra.mxu0 %v367
        %371 = vmatprep.subr.mxu0 0.0
        %372 = vmatpush1.xpose.msra.mxu0 0.0
        %373 = vmatprep.subr.mxu0 0.0
        %374 = vmatpush1.xpose.msra.mxu0 0.0
        %375 = vmatprep.subr.mxu0 0.0
        %376 = vmatpush1.xpose.msra.mxu0 0.0
        %377 = vmatprep.subr.mxu0 0.0
        %378 = vmatpush1.xpose.msra.mxu0 0.0
        %379 = vmatprep.subr.mxu0 0.0
        %380 = vmatpush1.xpose.msra.mxu0 0.0
        %381 = vmatprep.subr.mxu0 0.0
        %382 = vmatpush1.xpose.msra.mxu0 0.0
        %383 = vmatprep.subr.mxu0 0.0
        %384 = vmatpush1.xpose.msra.mxu0 0.0
        %385 = vmatprep.subr.mxu0 0.0
        %386 = vmatpush1.xpose.msra.mxu0 0.0
        %387 = vmatprep.subr.mxu0 0.0
        %388 = vmatpush1.xpose.msra.mxu0 0.0
        %389 = vmatprep.subr.mxu0 0.0
        %390 = vmatpush1.xpose.msra.mxu0 0.0
        %391 = vmatprep.subr.mxu0 0.0
        %392 = vmatpush1.xpose.msra.mxu0 0.0
        %393 = vmatprep.subr.mxu0 0.0
        %394 = vmatpush1.xpose.msra.mxu0 0.0
        %395 = vmatprep.subr.mxu0 0.0
        %396 = vmatpush1.xpose.msra.mxu0 0.0
        %397 = vmatprep.subr.mxu0 0.0
        %398 = vmatpush1.xpose.msra.mxu0 0.0
        %399 = vmatprep.subr.mxu0 0.0
        %400 = vmatpush1.xpose.msra.mxu0 0.0
        %401 = vmatprep.subr.mxu0 0.0
        %402 = vmatpush1.xpose.msra.mxu0 0.0
        %403 = vmatprep.subr.mxu0 0.0
        %404 = vmatpush1.xpose.msra.mxu0 0.0
        %405 = vmatprep.subr.mxu0 0.0
        %406 = vmatpush1.xpose.msra.mxu0 0.0
        %407 = vmatprep.subr.mxu0 0.0
        %408 = vmatpush1.xpose.msra.mxu0 0.0
        %409 = vmatprep.subr.mxu0 0.0
        %410 = vmatpush1.xpose.msra.mxu0 0.0
        %411 = vmatprep.subr.mxu0 0.0
        %412 = vmatpush1.xpose.msra.mxu0 0.0
        %413 = vmatprep.subr.mxu0 0.0
        %414 = vmatpush1.xpose.msra.mxu0 0.0
        %415 = vmatprep.subr.mxu0 0.0
        %416 = vmatpush1.xpose.msra.mxu0 0.0
        %417 = vmatprep.subr.mxu0 0.0
        %418 = vmatpush1.xpose.msra.mxu0 0.0
        %419 = vmatprep.subr.mxu0 0.0
        %420 = vmatpush1.xpose.msra.mxu0 0.0
        %421 = vmatprep.subr.mxu0 0.0
        %422 = vmatpush1.xpose.msra.mxu0 0.0
        %423 = vmatprep.subr.mxu0 0.0
        %424 = vmatpush1.xpose.msra.mxu0 0.0
        %425 = vmatprep.subr.mxu0 0.0
        %426 = vmatpush1.xpose.msra.mxu0 0.0
        %427 = vmatprep.subr.mxu0 0.0
        %428 = vmatpush1.xpose.msra.mxu0 0.0
        %429 = vmatprep.subr.mxu0 0.0
        %430 = vmatpush1.xpose.msra.mxu0 0.0
        %431 = vmatprep.subr.mxu0 0.0
        %432 = vmatpush1.xpose.msra.mxu0 0.0
        %433 = vmatprep.mubr.f32.mxu0 0.0
        %434 = vmatmul.mubr.f32.gmra.mrb[0].mxu0 %v365
        %v435 = vpop.f32.mrb[0].mxu0
        %v436 = vadd.f32 0.0, %v435
        %v437 = vpop.f32.mrb[0].mxu0
        %438 = vdwg.mxu0
        %vm439 = vcmask 64512
        %v440 = vsel %vm439, %v436, -inf
        %441 = vmax.xlane.f32.xlu0 %v440
        %v442 = vpop.xlane.xlu0 %441
        %v443 = vsub.f32 %v436, %v442
        %v444 = vmul.f32 %v443, 1.442695
        %v445 = vpow.pop %v444
        %v446 = vsel %vm439, %v445, 0.0
        %447 = vadd.xlane.f32.xlu0 %v446
        %v448 = vpop.xlane.xlu0 %447
        %v449 = vrcp.pop %v448
        %v450 = vmul.f32 %v445, %v449
        %451 = vst.msk [vmem:[%s279] sm:$0xff] %vm439, %v450
        %452 = vrot.lane.b32.xlu0 %v356, 64
        %v453 = vpop.permute.xlu0 %452
        %v456 = vsel %vm439, %v450, 0
        %458 = vmatprep.subr.mxu0 0.0
        %459 = vmatpush1.msra.mxu0 %v453
        %460 = vmatprep.subr.mxu0 0.0
        %461 = vmatpush1.msra.mxu0 0.0
        %462 = vmatprep.subr.mxu0 0.0
        %463 = vmatpush1.msra.mxu0 0.0
        %464 = vmatprep.subr.mxu0 0.0
        %465 = vmatpush1.msra.mxu0 0.0
        %466 = vmatprep.subr.mxu0 0.0
        %467 = vmatpush1.msra.mxu0 0.0
        %468 = vmatprep.subr.mxu0 0.0
        %469 = vmatpush1.msra.mxu0 0.0
        %470 = vmatprep.subr.mxu0 0.0
        %471 = vmatpush1.msra.mxu0 0.0
        %472 = vmatprep.subr.mxu0 0.0
        %473 = vmatpush1.msra.mxu0 0.0
        %474 = vmatprep.subr.mxu0 0.0
        %475 = vmatpush1.msra.mxu0 0.0
        %476 = vmatprep.subr.mxu0 0.0
        %477 = vmatpush1.msra.mxu0 0.0
        %478 = vmatprep.subr.mxu0 0.0
        %479 = vmatpush1.msra.mxu0 0.0
        %480 = vmatprep.subr.mxu0 0.0
        %481 = vmatpush1.msra.mxu0 0.0
        %482 = vmatprep.subr.mxu0 0.0
        %483 = vmatpush1.msra.mxu0 0.0
        %484 = vmatprep.subr.mxu0 0.0
        %485 = vmatpush1.msra.mxu0 0.0
        %486 = vmatprep.subr.mxu0 0.0
        %487 = vmatpush1.msra.mxu0 0.0
        %488 = vmatprep.subr.mxu0 0.0
        %489 = vmatpush1.msra.mxu0 0.0
        %490 = vmatprep.subr.mxu0 0.0
        %491 = vmatpush1.msra.mxu0 0.0
        %492 = vmatprep.subr.mxu0 0.0
        %493 = vmatpush1.msra.mxu0 0.0
        %494 = vmatprep.subr.mxu0 0.0
        %495 = vmatpush1.msra.mxu0 0.0
        %496 = vmatprep.subr.mxu0 0.0
        %497 = vmatpush1.msra.mxu0 0.0
        %498 = vmatprep.subr.mxu0 0.0
        %499 = vmatpush1.msra.mxu0 0.0
        %500 = vmatprep.subr.mxu0 0.0
        %501 = vmatpush1.msra.mxu0 0.0
        %502 = vmatprep.subr.mxu0 0.0
        %503 = vmatpush1.msra.mxu0 0.0
        %504 = vmatprep.subr.mxu0 0.0
        %505 = vmatpush1.msra.mxu0 0.0
        %506 = vmatprep.subr.mxu0 0.0
        %507 = vmatpush1.msra.mxu0 0.0
        %508 = vmatprep.subr.mxu0 0.0
        %509 = vmatpush1.msra.mxu0 0.0
        %510 = vmatprep.subr.mxu0 0.0
        %511 = vmatpush1.msra.mxu0 0.0
        %512 = vmatprep.subr.mxu0 0.0
        %513 = vmatpush1.msra.mxu0 0.0
        %514 = vmatprep.subr.mxu0 0.0
        %515 = vmatpush1.msra.mxu0 0.0
        %516 = vmatprep.subr.mxu0 0.0
        %517 = vmatpush1.msra.mxu0 0.0
        %518 = vmatprep.subr.mxu0 0.0
        %519 = vmatpush1.msra.mxu0 0.0
        %520 = vmatprep.subr.mxu0 0.0
        %521 = vmatpush1.msra.mxu0 0.0
        %522 = vmatprep.mubr.f32.mxu0 0.0
        %523 = vmatmul.mubr.f32.gmra.mrb[0].mxu0 %v456
        %v524 = vpop.f32.mrb[0].mxu0
        %v525 = vadd.f32 0.0, %v524
        %v526 = vpop.f32.mrb[0].mxu0
        %527 = vdwg.mxu0
        %528 = vrot.lane.b32.xlu0 %v359, 124
        %v529 = vpop.permute.xlu0 %528
        %530 = vrot.lane.b32.xlu0 %v356, 92
        %v531 = vpop.permute.xlu0 %530
        %v532 = vsel %vm363, %v529, 0
        %v534 = vsel %vm363, %v531, 0
        %536 = vmatprep.subr.mxu0 0.0
        %537 = vmatpush1.xpose.msra.mxu0 %v534
        %538 = vmatprep.subr.mxu0 0.0
        %539 = vmatpush1.xpose.msra.mxu0 0.0
        %540 = vmatprep.subr.mxu0 0.0
        %541 = vmatpush1.xpose.msra.mxu0 0.0
        %542 = vmatprep.subr.mxu0 0.0
        %543 = vmatpush1.xpose.msra.mxu0 0.0
        %544 = vmatprep.subr.mxu0 0.0
        %545 = vmatpush1.xpose.msra.mxu0 0.0
        %546 = vmatprep.subr.mxu0 0.0
        %547 = vmatpush1.xpose.msra.mxu0 0.0
        %548 = vmatprep.subr.mxu0 0.0
        %549 = vmatpush1.xpose.msra.mxu0 0.0
        %550 = vmatprep.subr.mxu0 0.0
        %551 = vmatpush1.xpose.msra.mxu0 0.0
        %552 = vmatprep.subr.mxu0 0.0
        %553 = vmatpush1.xpose.msra.mxu0 0.0
        %554 = vmatprep.subr.mxu0 0.0
        %555 = vmatpush1.xpose.msra.mxu0 0.0
        %556 = vmatprep.subr.mxu0 0.0
        %557 = vmatpush1.xpose.msra.mxu0 0.0
        %558 = vmatprep.subr.mxu0 0.0
        %559 = vmatpush1.xpose.msra.mxu0 0.0
        %560 = vmatprep.subr.mxu0 0.0
        %561 = vmatpush1.xpose.msra.mxu0 0.0
        %562 = vmatprep.subr.mxu0 0.0
        %563 = vmatpush1.xpose.msra.mxu0 0.0
        %564 = vmatprep.subr.mxu0 0.0
        %565 = vmatpush1.xpose.msra.mxu0 0.0
        %566 = vmatprep.subr.mxu0 0.0
        %567 = vmatpush1.xpose.msra.mxu0 0.0
        %568 = vmatprep.subr.mxu0 0.0
        %569 = vmatpush1.xpose.msra.mxu0 0.0
        %570 = vmatprep.subr.mxu0 0.0
        %571 = vmatpush1.xpose.msra.mxu0 0.0
        %572 = vmatprep.subr.mxu0 0.0
        %573 = vmatpush1.xpose.msra.mxu0 0.0
        %574 = vmatprep.subr.mxu0 0.0
        %575 = vmatpush1.xpose.msra.mxu0 0.0
        %576 = vmatprep.subr.mxu0 0.0
        %577 = vmatpush1.xpose.msra.mxu0 0.0
        %578 = vmatprep.subr.mxu0 0.0
        %579 = vmatpush1.xpose.msra.mxu0 0.0
        %580 = vmatprep.subr.mxu0 0.0
        %581 = vmatpush1.xpose.msra.mxu0 0.0
        %582 = vmatprep.subr.mxu0 0.0
        %583 = vmatpush1.xpose.msra.mxu0 0.0
        %584 = vmatprep.subr.mxu0 0.0
        %585 = vmatpush1.xpose.msra.mxu0 0.0
        %586 = vmatprep.subr.mxu0 0.0
        %587 = vmatpush1.xpose.msra.mxu0 0.0
        %588 = vmatprep.subr.mxu0 0.0
        %589 = vmatpush1.xpose.msra.mxu0 0.0
        %590 = vmatprep.subr.mxu0 0.0
        %591 = vmatpush1.xpose.msra.mxu0 0.0
        %592 = vmatprep.subr.mxu0 0.0
        %593 = vmatpush1.xpose.msra.mxu0 0.0
        %594 = vmatprep.subr.mxu0 0.0
        %595 = vmatpush1.xpose.msra.mxu0 0.0
        %596 = vmatprep.subr.mxu0 0.0
        %597 = vmatpush1.xpose.msra.mxu0 0.0
        %598 = vmatprep.subr.mxu0 0.0
        %599 = vmatpush1.xpose.msra.mxu0 0.0
        %600 = vmatprep.mubr.f32.mxu0 0.0
        %601 = vmatmul.mubr.f32.gmra.mrb[0].mxu0 %v532
        %v602 = vpop.f32.mrb[0].mxu0
        %v603 = vadd.f32 0.0, %v602
        %v604 = vpop.f32.mrb[0].mxu0
        %605 = vdwg.mxu0
        %v606 = vsel %vm439, %v603, -inf
        %607 = vmax.xlane.f32.xlu0 %v606
        %v608 = vpop.xlane.xlu0 %607
        %v609 = vsub.f32 %v603, %v608
        %v610 = vmul.f32 %v609, 1.442695
        %v611 = vpow.pop %v610
        %v612 = vsel %vm439, %v611, 0.0
        %613 = vadd.xlane.f32.xlu0 %v612
        %v614 = vpop.xlane.xlu0 %613
        %v615 = vrcp.pop %v614
        %v616 = vmul.f32 %v611, %v615
        %s617 = scalar_lea.vmem %s279, 8 [#allocation9]
        %618 = vst.msk [vmem:[%s617] sm:$0xff] %vm439, %v616
        %619 = vrot.lane.b32.xlu0 %v356, 60
        %v620 = vpop.permute.xlu0 %619
        %v623 = vsel %vm439, %v616, 0
        %625 = vmatprep.subr.mxu0 0.0
        %626 = vmatpush1.msra.mxu0 %v620
        %627 = vmatprep.subr.mxu0 0.0
        %628 = vmatpush1.msra.mxu0 0.0
        %629 = vmatprep.subr.mxu0 0.0
        %630 = vmatpush1.msra.mxu0 0.0
        %631 = vmatprep.subr.mxu0 0.0
        %632 = vmatpush1.msra.mxu0 0.0
        %633 = vmatprep.subr.mxu0 0.0
        %634 = vmatpush1.msra.mxu0 0.0
        %635 = vmatprep.subr.mxu0 0.0
        %636 = vmatpush1.msra.mxu0 0.0
        %637 = vmatprep.subr.mxu0 0.0
        %638 = vmatpush1.msra.mxu0 0.0
        %639 = vmatprep.subr.mxu0 0.0
        %640 = vmatpush1.msra.mxu0 0.0
        %641 = vmatprep.subr.mxu0 0.0
        %642 = vmatpush1.msra.mxu0 0.0
        %643 = vmatprep.subr.mxu0 0.0
        %644 = vmatpush1.msra.mxu0 0.0
        %645 = vmatprep.subr.mxu0 0.0
        %646 = vmatpush1.msra.mxu0 0.0
        %647 = vmatprep.subr.mxu0 0.0
        %648 = vmatpush1.msra.mxu0 0.0
        %649 = vmatprep.subr.mxu0 0.0
        %650 = vmatpush1.msra.mxu0 0.0
        %651 = vmatprep.subr.mxu0 0.0
        %652 = vmatpush1.msra.mxu0 0.0
        %653 = vmatprep.subr.mxu0 0.0
        %654 = vmatpush1.msra.mxu0 0.0
        %655 = vmatprep.subr.mxu0 0.0
        %656 = vmatpush1.msra.mxu0 0.0
        %657 = vmatprep.subr.mxu0 0.0
        %658 = vmatpush1.msra.mxu0 0.0
        %659 = vmatprep.subr.mxu0 0.0
        %660 = vmatpush1.msra.mxu0 0.0
        %661 = vmatprep.subr.mxu0 0.0
        %662 = vmatpush1.msra.mxu0 0.0
        %663 = vmatprep.subr.mxu0 0.0
        %664 = vmatpush1.msra.mxu0 0.0
        %665 = vmatprep.subr.mxu0 0.0
        %666 = vmatpush1.msra.mxu0 0.0
        %667 = vmatprep.subr.mxu0 0.0
        %668 = vmatpush1.msra.mxu0 0.0
        %669 = vmatprep.subr.mxu0 0.0
        %670 = vmatpush1.msra.mxu0 0.0
        %671 = vmatprep.subr.mxu0 0.0
        %672 = vmatpush1.msra.mxu0 0.0
        %673 = vmatprep.subr.mxu0 0.0
        %674 = vmatpush1.msra.mxu0 0.0
        %675 = vmatprep.subr.mxu0 0.0
        %676 = vmatpush1.msra.mxu0 0.0
        %677 = vmatprep.subr.mxu0 0.0
        %678 = vmatpush1.msra.mxu0 0.0
        %679 = vmatprep.subr.mxu0 0.0
        %680 = vmatpush1.msra.mxu0 0.0
        %681 = vmatprep.subr.mxu0 0.0
        %682 = vmatpush1.msra.mxu0 0.0
        %683 = vmatprep.subr.mxu0 0.0
        %684 = vmatpush1.msra.mxu0 0.0
        %685 = vmatprep.subr.mxu0 0.0
        %686 = vmatpush1.msra.mxu0 0.0
        %687 = vmatprep.subr.mxu0 0.0
        %688 = vmatpush1.msra.mxu0 0.0
        %689 = vmatprep.mubr.f32.mxu0 0.0
        %690 = vmatmul.mubr.f32.gmra.mrb[0].mxu0 %v623
        %v691 = vpop.f32.mrb[0].mxu0
        %v692 = vadd.f32 0.0, %v691
        %v693 = vpop.f32.mrb[0].mxu0
        %694 = vdwg.mxu0
        %695 = vrot.lane.b32.xlu0 %v359, 120
        %v696 = vpop.permute.xlu0 %695
        %697 = vrot.lane.b32.xlu0 %v356, 88
        %v698 = vpop.permute.xlu0 %697
        %v699 = vsel %vm363, %v696, 0
        %v701 = vsel %vm363, %v698, 0
        %703 = vmatprep.subr.mxu0 0.0
        %704 = vmatpush1.xpose.msra.mxu0 %v701
        %705 = vmatprep.subr.mxu0 0.0
        %706 = vmatpush1.xpose.msra.mxu0 0.0
        %707 = vmatprep.subr.mxu0 0.0
        %708 = vmatpush1.xpose.msra.mxu0 0.0
        %709 = vmatprep.subr.mxu0 0.0
        %710 = vmatpush1.xpose.msra.mxu0 0.0
        %711 = vmatprep.subr.mxu0 0.0
        %712 = vmatpush1.xpose.msra.mxu0 0.0
        %713 = vmatprep.subr.mxu0 0.0
        %714 = vmatpush1.xpose.msra.mxu0 0.0
        %715 = vmatprep.subr.mxu0 0.0
        %716 = vmatpush1.xpose.msra.mxu0 0.0
        %717 = vmatprep.subr.mxu0 0.0
        %718 = vmatpush1.xpose.msra.mxu0 0.0
        %719 = vmatprep.subr.mxu0 0.0
        %720 = vmatpush1.xpose.msra.mxu0 0.0
        %721 = vmatprep.subr.mxu0 0.0
        %722 = vmatpush1.xpose.msra.mxu0 0.0
        %723 = vmatprep.subr.mxu0 0.0
        %724 = vmatpush1.xpose.msra.mxu0 0.0
        %725 = vmatprep.subr.mxu0 0.0
        %726 = vmatpush1.xpose.msra.mxu0 0.0
        %727 = vmatprep.subr.mxu0 0.0
        %728 = vmatpush1.xpose.msra.mxu0 0.0
        %729 = vmatprep.subr.mxu0 0.0
        %730 = vmatpush1.xpose.msra.mxu0 0.0
        %731 = vmatprep.subr.mxu0 0.0
        %732 = vmatpush1.xpose.msra.mxu0 0.0
        %733 = vmatprep.subr.mxu0 0.0
        %734 = vmatpush1.xpose.msra.mxu0 0.0
        %735 = vmatprep.subr.mxu0 0.0
        %736 = vmatpush1.xpose.msra.mxu0 0.0
        %737 = vmatprep.subr.mxu0 0.0
        %738 = vmatpush1.xpose.msra.mxu0 0.0
        %739 = vmatprep.subr.mxu0 0.0
        %740 = vmatpush1.xpose.msra.mxu0 0.0
        %741 = vmatprep.subr.mxu0 0.0
        %742 = vmatpush1.xpose.msra.mxu0 0.0
        %743 = vmatprep.subr.mxu0 0.0
        %744 = vmatpush1.xpose.msra.mxu0 0.0
        %745 = vmatprep.subr.mxu0 0.0
        %746 = vmatpush1.xpose.msra.mxu0 0.0
        %747 = vmatprep.subr.mxu0 0.0
        %748 = vmatpush1.xpose.msra.mxu0 0.0
        %749 = vmatprep.subr.mxu0 0.0
        %750 = vmatpush1.xpose.msra.mxu0 0.0
        %751 = vmatprep.subr.mxu0 0.0
        %752 = vmatpush1.xpose.msra.mxu0 0.0
        %753 = vmatprep.subr.mxu0 0.0
        %754 = vmatpush1.xpose.msra.mxu0 0.0
        %755 = vmatprep.subr.mxu0 0.0
        %756 = vmatpush1.xpose.msra.mxu0 0.0
        %757 = vmatprep.subr.mxu0 0.0
        %758 = vmatpush1.xpose.msra.mxu0 0.0
        %759 = vmatprep.subr.mxu0 0.0
        %760 = vmatpush1.xpose.msra.mxu0 0.0
        %761 = vmatprep.subr.mxu0 0.0
        %762 = vmatpush1.xpose.msra.mxu0 0.0
        %763 = vmatprep.subr.mxu0 0.0
        %764 = vmatpush1.xpose.msra.mxu0 0.0
        %765 = vmatprep.subr.mxu0 0.0
        %766 = vmatpush1.xpose.msra.mxu0 0.0
        %767 = vmatprep.mubr.f32.mxu0 0.0
        %768 = vmatmul.mubr.f32.gmra.mrb[0].mxu0 %v699
        %v769 = vpop.f32.mrb[0].mxu0
        %v770 = vadd.f32 0.0, %v769
        %v771 = vpop.f32.mrb[0].mxu0
        %772 = vdwg.mxu0
        %v773 = vsel %vm439, %v770, -inf
        %774 = vmax.xlane.f32.xlu0 %v773
        %v775 = vpop.xlane.xlu0 %774
        %v776 = vsub.f32 %v770, %v775
        %v777 = vmul.f32 %v776, 1.442695
        %v778 = vpow.pop %v777
        %v779 = vsel %vm439, %v778, 0.0
        %780 = vadd.xlane.f32.xlu0 %v779
        %v781 = vpop.xlane.xlu0 %780
        %v782 = vrcp.pop %v781
        %v783 = vmul.f32 %v778, %v782
        %s784 = scalar_lea.vmem %s279, 16 [#allocation9]
        %785 = vst.msk [vmem:[%s784] sm:$0xff] %vm439, %v783
        %786 = vrot.lane.b32.xlu0 %v356, 56
        %v787 = vpop.permute.xlu0 %786
        %v790 = vsel %vm439, %v783, 0
        %792 = vmatprep.subr.mxu0 0.0
        %793 = vmatpush1.msra.mxu0 %v787
        %794 = vmatprep.subr.mxu0 0.0
        %795 = vmatpush1.msra.mxu0 0.0
        %796 = vmatprep.subr.mxu0 0.0
        %797 = vmatpush1.msra.mxu0 0.0
        %798 = vmatprep.subr.mxu0 0.0
        %799 = vmatpush1.msra.mxu0 0.0
        %800 = vmatprep.subr.mxu0 0.0
        %801 = vmatpush1.msra.mxu0 0.0
        %802 = vmatprep.subr.mxu0 0.0
        %803 = vmatpush1.msra.mxu0 0.0
        %804 = vmatprep.subr.mxu0 0.0
        %805 = vmatpush1.msra.mxu0 0.0
        %806 = vmatprep.subr.mxu0 0.0
        %807 = vmatpush1.msra.mxu0 0.0
        %808 = vmatprep.subr.mxu0 0.0
        %809 = vmatpush1.msra.mxu0 0.0
        %810 = vmatprep.subr.mxu0 0.0
        %811 = vmatpush1.msra.mxu0 0.0
        %812 = vmatprep.subr.mxu0 0.0
        %813 = vmatpush1.msra.mxu0 0.0
        %814 = vmatprep.subr.mxu0 0.0
        %815 = vmatpush1.msra.mxu0 0.0
        %816 = vmatprep.subr.mxu0 0.0
        %817 = vmatpush1.msra.mxu0 0.0
        %818 = vmatprep.subr.mxu0 0.0
        %819 = vmatpush1.msra.mxu0 0.0
        %820 = vmatprep.subr.mxu0 0.0
        %821 = vmatpush1.msra.mxu0 0.0
        %822 = vmatprep.subr.mxu0 0.0
        %823 = vmatpush1.msra.mxu0 0.0
        %824 = vmatprep.subr.mxu0 0.0
        %825 = vmatpush1.msra.mxu0 0.0
        %826 = vmatprep.subr.mxu0 0.0
        %827 = vmatpush1.msra.mxu0 0.0
        %828 = vmatprep.subr.mxu0 0.0
        %829 = vmatpush1.msra.mxu0 0.0
        %830 = vmatprep.subr.mxu0 0.0
        %831 = vmatpush1.msra.mxu0 0.0
        %832 = vmatprep.subr.mxu0 0.0
        %833 = vmatpush1.msra.mxu0 0.0
        %834 = vmatprep.subr.mxu0 0.0
        %835 = vmatpush1.msra.mxu0 0.0
        %836 = vmatprep.subr.mxu0 0.0
        %837 = vmatpush1.msra.mxu0 0.0
        %838 = vmatprep.subr.mxu0 0.0
        %839 = vmatpush1.msra.mxu0 0.0
        %840 = vmatprep.subr.mxu0 0.0
        %841 = vmatpush1.msra.mxu0 0.0
        %842 = vmatprep.subr.mxu0 0.0
        %843 = vmatpush1.msra.mxu0 0.0
        %844 = vmatprep.subr.mxu0 0.0
        %845 = vmatpush1.msra.mxu0 0.0
        %846 = vmatprep.subr.mxu0 0.0
        %847 = vmatpush1.msra.mxu0 0.0
        %848 = vmatprep.subr.mxu0 0.0
        %849 = vmatpush1.msra.mxu0 0.0
        %850 = vmatprep.subr.mxu0 0.0
        %851 = vmatpush1.msra.mxu0 0.0
        %852 = vmatprep.subr.mxu0 0.0
        %853 = vmatpush1.msra.mxu0 0.0
        %854 = vmatprep.subr.mxu0 0.0
        %855 = vmatpush1.msra.mxu0 0.0
        %856 = vmatprep.mubr.f32.mxu0 0.0
        %857 = vmatmul.mubr.f32.gmra.mrb[0].mxu0 %v790
        %v858 = vpop.f32.mrb[0].mxu0
        %v859 = vadd.f32 0.0, %v858
        %v860 = vpop.f32.mrb[0].mxu0
        %861 = vdwg.mxu0
        %862 = vrot.lane.b32.xlu0 %v359, 116
        %v863 = vpop.permute.xlu0 %862
        %864 = vrot.lane.b32.xlu0 %v356, 84
        %v865 = vpop.permute.xlu0 %864
        %v866 = vsel %vm363, %v863, 0
        %v868 = vsel %vm363, %v865, 0
        %870 = vmatprep.subr.mxu0 0.0
        %871 = vmatpush1.xpose.msra.mxu0 %v868
        %872 = vmatprep.subr.mxu0 0.0
        %873 = vmatpush1.xpose.msra.mxu0 0.0
        %874 = vmatprep.subr.mxu0 0.0
        %875 = vmatpush1.xpose.msra.mxu0 0.0
        %876 = vmatprep.subr.mxu0 0.0
        %877 = vmatpush1.xpose.msra.mxu0 0.0
        %878 = vmatprep.subr.mxu0 0.0
        %879 = vmatpush1.xpose.msra.mxu0 0.0
        %880 = vmatprep.subr.mxu0 0.0
        %881 = vmatpush1.xpose.msra.mxu0 0.0
        %882 = vmatprep.subr.mxu0 0.0
        %883 = vmatpush1.xpose.msra.mxu0 0.0
        %884 = vmatprep.subr.mxu0 0.0
        %885 = vmatpush1.xpose.msra.mxu0 0.0
        %886 = vmatprep.subr.mxu0 0.0
        %887 = vmatpush1.xpose.msra.mxu0 0.0
        %888 = vmatprep.subr.mxu0 0.0
        %889 = vmatpush1.xpose.msra.mxu0 0.0
        %890 = vmatprep.subr.mxu0 0.0
        %891 = vmatpush1.xpose.msra.mxu0 0.0
        %892 = vmatprep.subr.mxu0 0.0
        %893 = vmatpush1.xpose.msra.mxu0 0.0
        %894 = vmatprep.subr.mxu0 0.0
        %895 = vmatpush1.xpose.msra.mxu0 0.0
        %896 = vmatprep.subr.mxu0 0.0
        %897 = vmatpush1.xpose.msra.mxu0 0.0
        %898 = vmatprep.subr.mxu0 0.0
        %899 = vmatpush1.xpose.msra.mxu0 0.0
        %900 = vmatprep.subr.mxu0 0.0
        %901 = vmatpush1.xpose.msra.mxu0 0.0
        %902 = vmatprep.subr.mxu0 0.0
        %903 = vmatpush1.xpose.msra.mxu0 0.0
        %904 = vmatprep.subr.mxu0 0.0
        %905 = vmatpush1.xpose.msra.mxu0 0.0
        %906 = vmatprep.subr.mxu0 0.0
        %907 = vmatpush1.xpose.msra.mxu0 0.0
        %908 = vmatprep.subr.mxu0 0.0
        %909 = vmatpush1.xpose.msra.mxu0 0.0
        %910 = vmatprep.subr.mxu0 0.0
        %911 = vmatpush1.xpose.msra.mxu0 0.0
        %912 = vmatprep.subr.mxu0 0.0
        %913 = vmatpush1.xpose.msra.mxu0 0.0
        %914 = vmatprep.subr.mxu0 0.0
        %915 = vmatpush1.xpose.msra.mxu0 0.0
        %916 = vmatprep.subr.mxu0 0.0
        %917 = vmatpush1.xpose.msra.mxu0 0.0
        %918 = vmatprep.subr.mxu0 0.0
        %919 = vmatpush1.xpose.msra.mxu0 0.0
        %920 = vmatprep.subr.mxu0 0.0
        %921 = vmatpush1.xpose.msra.mxu0 0.0
        %922 = vmatprep.subr.mxu0 0.0
        %923 = vmatpush1.xpose.msra.mxu0 0.0
        %924 = vmatprep.subr.mxu0 0.0
        %925 = vmatpush1.xpose.msra.mxu0 0.0
        %926 = vmatprep.subr.mxu0 0.0
        %927 = vmatpush1.xpose.msra.mxu0 0.0
        %928 = vmatprep.subr.mxu0 0.0
        %929 = vmatpush1.xpose.msra.mxu0 0.0
        %930 = vmatprep.subr.mxu0 0.0
        %931 = vmatpush1.xpose.msra.mxu0 0.0
        %932 = vmatprep.subr.mxu0 0.0
        %933 = vmatpush1.xpose.msra.mxu0 0.0
        %934 = vmatprep.mubr.f32.mxu0 0.0
        %935 = vmatmul.mubr.f32.gmra.mrb[0].mxu0 %v866
        %v936 = vpop.f32.mrb[0].mxu0
        %v937 = vadd.f32 0.0, %v936
        %v938 = vpop.f32.mrb[0].mxu0
        %939 = vdwg.mxu0
        %v940 = vsel %vm439, %v937, -inf
        %941 = vmax.xlane.f32.xlu0 %v940
        %v942 = vpop.xlane.xlu0 %941
        %v943 = vsub.f32 %v937, %v942
        %v944 = vmul.f32 %v943, 1.442695
        %v945 = vpow.pop %v944
        %v946 = vsel %vm439, %v945, 0.0
        %947 = vadd.xlane.f32.xlu0 %v946
        %v948 = vpop.xlane.xlu0 %947
        %v949 = vrcp.pop %v948
        %v950 = vmul.f32 %v945, %v949
        %s951 = scalar_lea.vmem %s279, 24 [#allocation9]
        %952 = vst.msk [vmem:[%s951] sm:$0xff] %vm439, %v950
        %953 = vrot.lane.b32.xlu0 %v356, 52
        %v954 = vpop.permute.xlu0 %953
        %v957 = vsel %vm439, %v950, 0
        %959 = vmatprep.subr.mxu0 0.0
        %960 = vmatpush1.msra.mxu0 %v954
        %961 = vmatprep.subr.mxu0 0.0
        %962 = vmatpush1.msra.mxu0 0.0
        %963 = vmatprep.subr.mxu0 0.0
        %964 = vmatpush1.msra.mxu0 0.0
        %965 = vmatprep.subr.mxu0 0.0
        %966 = vmatpush1.msra.mxu0 0.0
        %967 = vmatprep.subr.mxu0 0.0
        %968 = vmatpush1.msra.mxu0 0.0
        %969 = vmatprep.subr.mxu0 0.0
        %970 = vmatpush1.msra.mxu0 0.0
        %971 = vmatprep.subr.mxu0 0.0
        %972 = vmatpush1.msra.mxu0 0.0
        %973 = vmatprep.subr.mxu0 0.0
        %974 = vmatpush1.msra.mxu0 0.0
        %975 = vmatprep.subr.mxu0 0.0
        %976 = vmatpush1.msra.mxu0 0.0
        %977 = vmatprep.subr.mxu0 0.0
        %978 = vmatpush1.msra.mxu0 0.0
        %979 = vmatprep.subr.mxu0 0.0
        %980 = vmatpush1.msra.mxu0 0.0
        %981 = vmatprep.subr.mxu0 0.0
        %982 = vmatpush1.msra.mxu0 0.0
        %983 = vmatprep.subr.mxu0 0.0
        %984 = vmatpush1.msra.mxu0 0.0
        %985 = vmatprep.subr.mxu0 0.0
        %986 = vmatpush1.msra.mxu0 0.0
        %987 = vmatprep.subr.mxu0 0.0
        %988 = vmatpush1.msra.mxu0 0.0
        %989 = vmatprep.subr.mxu0 0.0
        %990 = vmatpush1.msra.mxu0 0.0
        %991 = vmatprep.subr.mxu0 0.0
        %992 = vmatpush1.msra.mxu0 0.0
        %993 = vmatprep.subr.mxu0 0.0
        %994 = vmatpush1.msra.mxu0 0.0
        %995 = vmatprep.subr.mxu0 0.0
        %996 = vmatpush1.msra.mxu0 0.0
        %997 = vmatprep.subr.mxu0 0.0
        %998 = vmatpush1.msra.mxu0 0.0
        %999 = vmatprep.subr.mxu0 0.0
        %1000 = vmatpush1.msra.mxu0 0.0
        %1001 = vmatprep.subr.mxu0 0.0
        %1002 = vmatpush1.msra.mxu0 0.0
        %1003 = vmatprep.subr.mxu0 0.0
        %1004 = vmatpush1.msra.mxu0 0.0
        %1005 = vmatprep.subr.mxu0 0.0
        %1006 = vmatpush1.msra.mxu0 0.0
        %1007 = vmatprep.subr.mxu0 0.0
        %1008 = vmatpush1.msra.mxu0 0.0
        %1009 = vmatprep.subr.mxu0 0.0
        %1010 = vmatpush1.msra.mxu0 0.0
        %1011 = vmatprep.subr.mxu0 0.0
        %1012 = vmatpush1.msra.mxu0 0.0
        %1013 = vmatprep.subr.mxu0 0.0
        %1014 = vmatpush1.msra.mxu0 0.0
        %1015 = vmatprep.subr.mxu0 0.0
        %1016 = vmatpush1.msra.mxu0 0.0
        %1017 = vmatprep.subr.mxu0 0.0
        %1018 = vmatpush1.msra.mxu0 0.0
        %1019 = vmatprep.subr.mxu0 0.0
        %1020 = vmatpush1.msra.mxu0 0.0
        %1021 = vmatprep.subr.mxu0 0.0
        %1022 = vmatpush1.msra.mxu0 0.0
        %1023 = vmatprep.mubr.f32.mxu0 0.0
        %1024 = vmatmul.mubr.f32.gmra.mrb[0].mxu0 %v957
        %v1025 = vpop.f32.mrb[0].mxu0
        %v1026 = vadd.f32 0.0, %v1025
        %v1027 = vpop.f32.mrb[0].mxu0
        %1028 = vdwg.mxu0
        %1029 = vrot.lane.b32.xlu0 %v359, 112
        %v1030 = vpop.permute.xlu0 %1029
        %1031 = vrot.lane.b32.xlu0 %v356, 80
        %v1032 = vpop.permute.xlu0 %1031
        %v1033 = vsel %vm363, %v1030, 0
        %v1035 = vsel %vm363, %v1032, 0
        %1037 = vmatprep.subr.mxu0 0.0
        %1038 = vmatpush1.xpose.msra.mxu0 %v1035
        %1039 = vmatprep.subr.mxu0 0.0
        %1040 = vmatpush1.xpose.msra.mxu0 0.0
        %1041 = vmatprep.subr.mxu0 0.0
        %1042 = vmatpush1.xpose.msra.mxu0 0.0
        %1043 = vmatprep.subr.mxu0 0.0
        %1044 = vmatpush1.xpose.msra.mxu0 0.0
        %1045 = vmatprep.subr.mxu0 0.0
        %1046 = vmatpush1.xpose.msra.mxu0 0.0
        %1047 = vmatprep.subr.mxu0 0.0
        %1048 = vmatpush1.xpose.msra.mxu0 0.0
        %1049 = vmatprep.subr.mxu0 0.0
        %1050 = vmatpush1.xpose.msra.mxu0 0.0
        %1051 = vmatprep.subr.mxu0 0.0
        %1052 = vmatpush1.xpose.msra.mxu0 0.0
        %1053 = vmatprep.subr.mxu0 0.0
        %1054 = vmatpush1.xpose.msra.mxu0 0.0
        %1055 = vmatprep.subr.mxu0 0.0
        %1056 = vmatpush1.xpose.msra.mxu0 0.0
        %1057 = vmatprep.subr.mxu0 0.0
        %1058 = vmatpush1.xpose.msra.mxu0 0.0
        %1059 = vmatprep.subr.mxu0 0.0
        %1060 = vmatpush1.xpose.msra.mxu0 0.0
        %1061 = vmatprep.subr.mxu0 0.0
        %1062 = vmatpush1.xpose.msra.mxu0 0.0
        %1063 = vmatprep.subr.mxu0 0.0
        %1064 = vmatpush1.xpose.msra.mxu0 0.0
        %1065 = vmatprep.subr.mxu0 0.0
        %1066 = vmatpush1.xpose.msra.mxu0 0.0
        %1067 = vmatprep.subr.mxu0 0.0
        %1068 = vmatpush1.xpose.msra.mxu0 0.0
        %1069 = vmatprep.subr.mxu0 0.0
        %1070 = vmatpush1.xpose.msra.mxu0 0.0
        %1071 = vmatprep.subr.mxu0 0.0
        %1072 = vmatpush1.xpose.msra.mxu0 0.0
        %1073 = vmatprep.subr.mxu0 0.0
        %1074 = vmatpush1.xpose.msra.mxu0 0.0
        %1075 = vmatprep.subr.mxu0 0.0
        %1076 = vmatpush1.xpose.msra.mxu0 0.0
        %1077 = vmatprep.subr.mxu0 0.0
        %1078 = vmatpush1.xpose.msra.mxu0 0.0
        %1079 = vmatprep.subr.mxu0 0.0
        %1080 = vmatpush1.xpose.msra.mxu0 0.0
        %1081 = vmatprep.subr.mxu0 0.0
        %1082 = vmatpush1.xpose.msra.mxu0 0.0
        %1083 = vmatprep.subr.mxu0 0.0
        %1084 = vmatpush1.xpose.msra.mxu0 0.0
        %1085 = vmatprep.subr.mxu0 0.0
        %1086 = vmatpush1.xpose.msra.mxu0 0.0
        %1087 = vmatprep.subr.mxu0 0.0
        %1088 = vmatpush1.xpose.msra.mxu0 0.0
        %1089 = vmatprep.subr.mxu0 0.0
        %1090 = vmatpush1.xpose.msra.mxu0 0.0
        %1091 = vmatprep.subr.mxu0 0.0
        %1092 = vmatpush1.xpose.msra.mxu0 0.0
        %1093 = vmatprep.subr.mxu0 0.0
        %1094 = vmatpush1.xpose.msra.mxu0 0.0
        %1095 = vmatprep.subr.mxu0 0.0
        %1096 = vmatpush1.xpose.msra.mxu0 0.0
        %1097 = vmatprep.subr.mxu0 0.0
        %1098 = vmatpush1.xpose.msra.mxu0 0.0
        %1099 = vmatprep.subr.mxu0 0.0
        %1100 = vmatpush1.xpose.msra.mxu0 0.0
        %1101 = vmatprep.mubr.f32.mxu0 0.0
        %1102 = vmatmul.mubr.f32.gmra.mrb[0].mxu0 %v1033
        %v1103 = vpop.f32.mrb[0].mxu0
        %v1104 = vadd.f32 0.0, %v1103
        %v1105 = vpop.f32.mrb[0].mxu0
        %1106 = vdwg.mxu0
        %v1107 = vsel %vm439, %v1104, -inf
        %1108 = vmax.xlane.f32.xlu0 %v1107
        %v1109 = vpop.xlane.xlu0 %1108
        %v1110 = vsub.f32 %v1104, %v1109
        %v1111 = vmul.f32 %v1110, 1.442695
        %v1112 = vpow.pop %v1111
        %v1113 = vsel %vm439, %v1112, 0.0
        %1114 = vadd.xlane.f32.xlu0 %v1113
        %v1115 = vpop.xlane.xlu0 %1114
        %v1116 = vrcp.pop %v1115
        %v1117 = vmul.f32 %v1112, %v1116
        %s1118 = scalar_lea.vmem %s279, 32 [#allocation9]
        %1119 = vst.msk [vmem:[%s1118] sm:$0xff] %vm439, %v1117
        %1120 = vrot.lane.b32.xlu0 %v356, 48
        %v1121 = vpop.permute.xlu0 %1120
        %v1124 = vsel %vm439, %v1117, 0
        %1126 = vmatprep.subr.mxu0 0.0
        %1127 = vmatpush1.msra.mxu0 %v1121
        %1128 = vmatprep.subr.mxu0 0.0
        %1129 = vmatpush1.msra.mxu0 0.0
        %1130 = vmatprep.subr.mxu0 0.0
        %1131 = vmatpush1.msra.mxu0 0.0
        %1132 = vmatprep.subr.mxu0 0.0
        %1133 = vmatpush1.msra.mxu0 0.0
        %1134 = vmatprep.subr.mxu0 0.0
        %1135 = vmatpush1.msra.mxu0 0.0
        %1136 = vmatprep.subr.mxu0 0.0
        %1137 = vmatpush1.msra.mxu0 0.0
        %1138 = vmatprep.subr.mxu0 0.0
        %1139 = vmatpush1.msra.mxu0 0.0
        %1140 = vmatprep.subr.mxu0 0.0
        %1141 = vmatpush1.msra.mxu0 0.0
        %1142 = vmatprep.subr.mxu0 0.0
        %1143 = vmatpush1.msra.mxu0 0.0
        %1144 = vmatprep.subr.mxu0 0.0
        %1145 = vmatpush1.msra.mxu0 0.0
        %1146 = vmatprep.subr.mxu0 0.0
        %1147 = vmatpush1.msra.mxu0 0.0
        %1148 = vmatprep.subr.mxu0 0.0
        %1149 = vmatpush1.msra.mxu0 0.0
        %1150 = vmatprep.subr.mxu0 0.0
        %1151 = vmatpush1.msra.mxu0 0.0
        %1152 = vmatprep.subr.mxu0 0.0
        %1153 = vmatpush1.msra.mxu0 0.0
        %1154 = vmatprep.subr.mxu0 0.0
        %1155 = vmatpush1.msra.mxu0 0.0
        %1156 = vmatprep.subr.mxu0 0.0
        %1157 = vmatpush1.msra.mxu0 0.0
        %1158 = vmatprep.subr.mxu0 0.0
        %1159 = vmatpush1.msra.mxu0 0.0
        %1160 = vmatprep.subr.mxu0 0.0
        %1161 = vmatpush1.msra.mxu0 0.0
        %1162 = vmatprep.subr.mxu0 0.0
        %1163 = vmatpush1.msra.mxu0 0.0
        %1164 = vmatprep.subr.mxu0 0.0
        %1165 = vmatpush1.msra.mxu0 0.0
        %1166 = vmatprep.subr.mxu0 0.0
        %1167 = vmatpush1.msra.mxu0 0.0
        %1168 = vmatprep.subr.mxu0 0.0
        %1169 = vmatpush1.msra.mxu0 0.0
        %1170 = vmatprep.subr.mxu0 0.0
        %1171 = vmatpush1.msra.mxu0 0.0
        %1172 = vmatprep.subr.mxu0 0.0
        %1173 = vmatpush1.msra.mxu0 0.0
        %1174 = vmatprep.subr.mxu0 0.0
        %1175 = vmatpush1.msra.mxu0 0.0
        %1176 = vmatprep.subr.mxu0 0.0
        %1177 = vmatpush1.msra.mxu0 0.0
        %1178 = vmatprep.subr.mxu0 0.0
        %1179 = vmatpush1.msra.mxu0 0.0
        %1180 = vmatprep.subr.mxu0 0.0
        %1181 = vmatpush1.msra.mxu0 0.0
        %1182 = vmatprep.subr.mxu0 0.0
        %1183 = vmatpush1.msra.mxu0 0.0
        %1184 = vmatprep.subr.mxu0 0.0
        %1185 = vmatpush1.msra.mxu0 0.0
        %1186 = vmatprep.subr.mxu0 0.0
        %1187 = vmatpush1.msra.mxu0 0.0
        %1188 = vmatprep.subr.mxu0 0.0
        %1189 = vmatpush1.msra.mxu0 0.0
        %1190 = vmatprep.mubr.f32.mxu0 0.0
        %1191 = vmatmul.mubr.f32.gmra.mrb[0].mxu0 %v1124
        %v1192 = vpop.f32.mrb[0].mxu0
        %v1193 = vadd.f32 0.0, %v1192
        %v1194 = vpop.f32.mrb[0].mxu0
        %1195 = vdwg.mxu0
        %1196 = vrot.lane.b32.xlu0 %v359, 108
        %v1197 = vpop.permute.xlu0 %1196
        %1198 = vrot.lane.b32.xlu0 %v356, 76
        %v1199 = vpop.permute.xlu0 %1198
        %v1200 = vsel %vm363, %v1197, 0
        %v1202 = vsel %vm363, %v1199, 0
        %1204 = vmatprep.subr.mxu0 0.0
        %1205 = vmatpush1.xpose.msra.mxu0 %v1202
        %1206 = vmatprep.subr.mxu0 0.0
        %1207 = vmatpush1.xpose.msra.mxu0 0.0
        %1208 = vmatprep.subr.mxu0 0.0
        %1209 = vmatpush1.xpose.msra.mxu0 0.0
        %1210 = vmatprep.subr.mxu0 0.0
        %1211 = vmatpush1.xpose.msra.mxu0 0.0
        %1212 = vmatprep.subr.mxu0 0.0
        %1213 = vmatpush1.xpose.msra.mxu0 0.0
        %1214 = vmatprep.subr.mxu0 0.0
        %1215 = vmatpush1.xpose.msra.mxu0 0.0
        %1216 = vmatprep.subr.mxu0 0.0
        %1217 = vmatpush1.xpose.msra.mxu0 0.0
        %1218 = vmatprep.subr.mxu0 0.0
        %1219 = vmatpush1.xpose.msra.mxu0 0.0
        %1220 = vmatprep.subr.mxu0 0.0
        %1221 = vmatpush1.xpose.msra.mxu0 0.0
        %1222 = vmatprep.subr.mxu0 0.0
        %1223 = vmatpush1.xpose.msra.mxu0 0.0
        %1224 = vmatprep.subr.mxu0 0.0
        %1225 = vmatpush1.xpose.msra.mxu0 0.0
        %1226 = vmatprep.subr.mxu0 0.0
        %1227 = vmatpush1.xpose.msra.mxu0 0.0
        %1228 = vmatprep.subr.mxu0 0.0
        %1229 = vmatpush1.xpose.msra.mxu0 0.0
        %1230 = vmatprep.subr.mxu0 0.0
        %1231 = vmatpush1.xpose.msra.mxu0 0.0
        %1232 = vmatprep.subr.mxu0 0.0
        %1233 = vmatpush1.xpose.msra.mxu0 0.0
        %1234 = vmatprep.subr.mxu0 0.0
        %1235 = vmatpush1.xpose.msra.mxu0 0.0
        %1236 = vmatprep.subr.mxu0 0.0
        %1237 = vmatpush1.xpose.msra.mxu0 0.0
        %1238 = vmatprep.subr.mxu0 0.0
        %1239 = vmatpush1.xpose.msra.mxu0 0.0
        %1240 = vmatprep.subr.mxu0 0.0
        %1241 = vmatpush1.xpose.msra.mxu0 0.0
        %1242 = vmatprep.subr.mxu0 0.0
        %1243 = vmatpush1.xpose.msra.mxu0 0.0
        %1244 = vmatprep.subr.mxu0 0.0
        %1245 = vmatpush1.xpose.msra.mxu0 0.0
        %1246 = vmatprep.subr.mxu0 0.0
        %1247 = vmatpush1.xpose.msra.mxu0 0.0
        %1248 = vmatprep.subr.mxu0 0.0
        %1249 = vmatpush1.xpose.msra.mxu0 0.0
        %1250 = vmatprep.subr.mxu0 0.0
        %1251 = vmatpush1.xpose.msra.mxu0 0.0
        %1252 = vmatprep.subr.mxu0 0.0
        %1253 = vmatpush1.xpose.msra.mxu0 0.0
        %1254 = vmatprep.subr.mxu0 0.0
        %1255 = vmatpush1.xpose.msra.mxu0 0.0
        %1256 = vmatprep.subr.mxu0 0.0
        %1257 = vmatpush1.xpose.msra.mxu0 0.0
        %1258 = vmatprep.subr.mxu0 0.0
        %1259 = vmatpush1.xpose.msra.mxu0 0.0
        %1260 = vmatprep.subr.mxu0 0.0
        %1261 = vmatpush1.xpose.msra.mxu0 0.0
        %1262 = vmatprep.subr.mxu0 0.0
        %1263 = vmatpush1.xpose.msra.mxu0 0.0
        %1264 = vmatprep.subr.mxu0 0.0
        %1265 = vmatpush1.xpose.msra.mxu0 0.0
        %1266 = vmatprep.subr.mxu0 0.0
        %1267 = vmatpush1.xpose.msra.mxu0 0.0
        %1268 = vmatprep.mubr.f32.mxu0 0.0
        %1269 = vmatmul.mubr.f32.gmra.mrb[0].mxu0 %v1200
        %v1270 = vpop.f32.mrb[0].mxu0
        %v1271 = vadd.f32 0.0, %v1270
        %v1272 = vpop.f32.mrb[0].mxu0
        %1273 = vdwg.mxu0
        %v1274 = vsel %vm439, %v1271, -inf
        %1275 = vmax.xlane.f32.xlu0 %v1274
        %v1276 = vpop.xlane.xlu0 %1275
        %v1277 = vsub.f32 %v1271, %v1276
        %v1278 = vmul.f32 %v1277, 1.442695
        %v1279 = vpow.pop %v1278
        %v1280 = vsel %vm439, %v1279, 0.0
        %1281 = vadd.xlane.f32.xlu0 %v1280
        %v1282 = vpop.xlane.xlu0 %1281
        %v1283 = vrcp.pop %v1282
        %v1284 = vmul.f32 %v1279, %v1283
        %s1285 = scalar_lea.vmem %s279, 40 [#allocation9]
        %1286 = vst.msk [vmem:[%s1285] sm:$0xff] %vm439, %v1284
        %1287 = vrot.lane.b32.xlu0 %v356, 44
        %v1288 = vpop.permute.xlu0 %1287
        %v1291 = vsel %vm439, %v1284, 0
        %1293 = vmatprep.subr.mxu0 0.0
        %1294 = vmatpush1.msra.mxu0 %v1288
        %1295 = vmatprep.subr.mxu0 0.0
        %1296 = vmatpush1.msra.mxu0 0.0
        %1297 = vmatprep.subr.mxu0 0.0
        %1298 = vmatpush1.msra.mxu0 0.0
        %1299 = vmatprep.subr.mxu0 0.0
        %1300 = vmatpush1.msra.mxu0 0.0
        %1301 = vmatprep.subr.mxu0 0.0
        %1302 = vmatpush1.msra.mxu0 0.0
        %1303 = vmatprep.subr.mxu0 0.0
        %1304 = vmatpush1.msra.mxu0 0.0
        %1305 = vmatprep.subr.mxu0 0.0
        %1306 = vmatpush1.msra.mxu0 0.0
        %1307 = vmatprep.subr.mxu0 0.0
        %1308 = vmatpush1.msra.mxu0 0.0
        %1309 = vmatprep.subr.mxu0 0.0
        %1310 = vmatpush1.msra.mxu0 0.0
        %1311 = vmatprep.subr.mxu0 0.0
        %1312 = vmatpush1.msra.mxu0 0.0
        %1313 = vmatprep.subr.mxu0 0.0
        %1314 = vmatpush1.msra.mxu0 0.0
        %1315 = vmatprep.subr.mxu0 0.0
        %1316 = vmatpush1.msra.mxu0 0.0
        %1317 = vmatprep.subr.mxu0 0.0
        %1318 = vmatpush1.msra.mxu0 0.0
        %1319 = vmatprep.subr.mxu0 0.0
        %1320 = vmatpush1.msra.mxu0 0.0
        %1321 = vmatprep.subr.mxu0 0.0
        %1322 = vmatpush1.msra.mxu0 0.0
        %1323 = vmatprep.subr.mxu0 0.0
        %1324 = vmatpush1.msra.mxu0 0.0
        %1325 = vmatprep.subr.mxu0 0.0
        %1326 = vmatpush1.msra.mxu0 0.0
        %1327 = vmatprep.subr.mxu0 0.0
        %1328 = vmatpush1.msra.mxu0 0.0
        %1329 = vmatprep.subr.mxu0 0.0
        %1330 = vmatpush1.msra.mxu0 0.0
        %1331 = vmatprep.subr.mxu0 0.0
        %1332 = vmatpush1.msra.mxu0 0.0
        %1333 = vmatprep.subr.mxu0 0.0
        %1334 = vmatpush1.msra.mxu0 0.0
        %1335 = vmatprep.subr.mxu0 0.0
        %1336 = vmatpush1.msra.mxu0 0.0
        %1337 = vmatprep.subr.mxu0 0.0
        %1338 = vmatpush1.msra.mxu0 0.0
        %1339 = vmatprep.subr.mxu0 0.0
        %1340 = vmatpush1.msra.mxu0 0.0
        %1341 = vmatprep.subr.mxu0 0.0
        %1342 = vmatpush1.msra.mxu0 0.0
        %1343 = vmatprep.subr.mxu0 0.0
        %1344 = vmatpush1.msra.mxu0 0.0
        %1345 = vmatprep.subr.mxu0 0.0
        %1346 = vmatpush1.msra.mxu0 0.0
        %1347 = vmatprep.subr.mxu0 0.0
        %1348 = vmatpush1.msra.mxu0 0.0
        %1349 = vmatprep.subr.mxu0 0.0
        %1350 = vmatpush1.msra.mxu0 0.0
        %1351 = vmatprep.subr.mxu0 0.0
        %1352 = vmatpush1.msra.mxu0 0.0
        %1353 = vmatprep.subr.mxu0 0.0
        %1354 = vmatpush1.msra.mxu0 0.0
        %1355 = vmatprep.subr.mxu0 0.0
        %1356 = vmatpush1.msra.mxu0 0.0
        %1357 = vmatprep.mubr.f32.mxu0 0.0
        %1358 = vmatmul.mubr.f32.gmra.mrb[0].mxu0 %v1291
        %v1359 = vpop.f32.mrb[0].mxu0
        %v1360 = vadd.f32 0.0, %v1359
        %v1361 = vpop.f32.mrb[0].mxu0
        %1362 = vdwg.mxu0
        %1363 = vrot.lane.b32.xlu0 %v359, 104
        %v1364 = vpop.permute.xlu0 %1363
        %1365 = vrot.lane.b32.xlu0 %v356, 72
        %v1366 = vpop.permute.xlu0 %1365
        %v1367 = vsel %vm363, %v1364, 0
        %v1369 = vsel %vm363, %v1366, 0
        %1371 = vmatprep.subr.mxu0 0.0
        %1372 = vmatpush1.xpose.msra.mxu0 %v1369
        %1373 = vmatprep.subr.mxu0 0.0
        %1374 = vmatpush1.xpose.msra.mxu0 0.0
        %1375 = vmatprep.subr.mxu0 0.0
        %1376 = vmatpush1.xpose.msra.mxu0 0.0
        %1377 = vmatprep.subr.mxu0 0.0
        %1378 = vmatpush1.xpose.msra.mxu0 0.0
        %1379 = vmatprep.subr.mxu0 0.0
        %1380 = vmatpush1.xpose.msra.mxu0 0.0
        %1381 = vmatprep.subr.mxu0 0.0
        %1382 = vmatpush1.xpose.msra.mxu0 0.0
        %1383 = vmatprep.subr.mxu0 0.0
        %1384 = vmatpush1.xpose.msra.mxu0 0.0
        %1385 = vmatprep.subr.mxu0 0.0
        %1386 = vmatpush1.xpose.msra.mxu0 0.0
        %1387 = vmatprep.subr.mxu0 0.0
        %1388 = vmatpush1.xpose.msra.mxu0 0.0
        %1389 = vmatprep.subr.mxu0 0.0
        %1390 = vmatpush1.xpose.msra.mxu0 0.0
        %1391 = vmatprep.subr.mxu0 0.0
        %1392 = vmatpush1.xpose.msra.mxu0 0.0
        %1393 = vmatprep.subr.mxu0 0.0
        %1394 = vmatpush1.xpose.msra.mxu0 0.0
        %1395 = vmatprep.subr.mxu0 0.0
        %1396 = vmatpush1.xpose.msra.mxu0 0.0
        %1397 = vmatprep.subr.mxu0 0.0
        %1398 = vmatpush1.xpose.msra.mxu0 0.0
        %1399 = vmatprep.subr.mxu0 0.0
        %1400 = vmatpush1.xpose.msra.mxu0 0.0
        %1401 = vmatprep.subr.mxu0 0.0
        %1402 = vmatpush1.xpose.msra.mxu0 0.0
        %1403 = vmatprep.subr.mxu0 0.0
        %1404 = vmatpush1.xpose.msra.mxu0 0.0
        %1405 = vmatprep.subr.mxu0 0.0
        %1406 = vmatpush1.xpose.msra.mxu0 0.0
        %1407 = vmatprep.subr.mxu0 0.0
        %1408 = vmatpush1.xpose.msra.mxu0 0.0
        %1409 = vmatprep.subr.mxu0 0.0
        %1410 = vmatpush1.xpose.msra.mxu0 0.0
        %1411 = vmatprep.subr.mxu0 0.0
        %1412 = vmatpush1.xpose.msra.mxu0 0.0
        %1413 = vmatprep.subr.mxu0 0.0
        %1414 = vmatpush1.xpose.msra.mxu0 0.0
        %1415 = vmatprep.subr.mxu0 0.0
        %1416 = vmatpush1.xpose.msra.mxu0 0.0
        %1417 = vmatprep.subr.mxu0 0.0
        %1418 = vmatpush1.xpose.msra.mxu0 0.0
        %1419 = vmatprep.subr.mxu0 0.0
        %1420 = vmatpush1.xpose.msra.mxu0 0.0
        %1421 = vmatprep.subr.mxu0 0.0
        %1422 = vmatpush1.xpose.msra.mxu0 0.0
        %1423 = vmatprep.subr.mxu0 0.0
        %1424 = vmatpush1.xpose.msra.mxu0 0.0
        %1425 = vmatprep.subr.mxu0 0.0
        %1426 = vmatpush1.xpose.msra.mxu0 0.0
        %1427 = vmatprep.subr.mxu0 0.0
        %1428 = vmatpush1.xpose.msra.mxu0 0.0
        %1429 = vmatprep.subr.mxu0 0.0
        %1430 = vmatpush1.xpose.msra.mxu0 0.0
        %1431 = vmatprep.subr.mxu0 0.0
        %1432 = vmatpush1.xpose.msra.mxu0 0.0
        %1433 = vmatprep.subr.mxu0 0.0
        %1434 = vmatpush1.xpose.msra.mxu0 0.0
        %1435 = vmatprep.mubr.f32.mxu0 0.0
        %1436 = vmatmul.mubr.f32.gmra.mrb[0].mxu0 %v1367
        %v1437 = vpop.f32.mrb[0].mxu0
        %v1438 = vadd.f32 0.0, %v1437
        %v1439 = vpop.f32.mrb[0].mxu0
        %1440 = vdwg.mxu0
        %v1441 = vsel %vm439, %v1438, -inf
        %1442 = vmax.xlane.f32.xlu0 %v1441
        %v1443 = vpop.xlane.xlu0 %1442
        %v1444 = vsub.f32 %v1438, %v1443
        %v1445 = vmul.f32 %v1444, 1.442695
        %v1446 = vpow.pop %v1445
        %v1447 = vsel %vm439, %v1446, 0.0
        %1448 = vadd.xlane.f32.xlu0 %v1447
        %v1449 = vpop.xlane.xlu0 %1448
        %v1450 = vrcp.pop %v1449
        %v1451 = vmul.f32 %v1446, %v1450
        %s1452 = scalar_lea.vmem %s279, 48 [#allocation9]
        %1453 = vst.msk [vmem:[%s1452] sm:$0xff] %vm439, %v1451
        %1454 = vrot.lane.b32.xlu0 %v356, 40
        %v1455 = vpop.permute.xlu0 %1454
        %v1458 = vsel %vm439, %v1451, 0
        %1460 = vmatprep.subr.mxu0 0.0
        %1461 = vmatpush1.msra.mxu0 %v1455
        %1462 = vmatprep.subr.mxu0 0.0
        %1463 = vmatpush1.msra.mxu0 0.0
        %1464 = vmatprep.subr.mxu0 0.0
        %1465 = vmatpush1.msra.mxu0 0.0
        %1466 = vmatprep.subr.mxu0 0.0
        %1467 = vmatpush1.msra.mxu0 0.0
        %1468 = vmatprep.subr.mxu0 0.0
        %1469 = vmatpush1.msra.mxu0 0.0
        %1470 = vmatprep.subr.mxu0 0.0
        %1471 = vmatpush1.msra.mxu0 0.0
        %1472 = vmatprep.subr.mxu0 0.0
        %1473 = vmatpush1.msra.mxu0 0.0
        %1474 = vmatprep.subr.mxu0 0.0
        %1475 = vmatpush1.msra.mxu0 0.0
        %1476 = vmatprep.subr.mxu0 0.0
        %1477 = vmatpush1.msra.mxu0 0.0
        %1478 = vmatprep.subr.mxu0 0.0
        %1479 = vmatpush1.msra.mxu0 0.0
        %1480 = vmatprep.subr.mxu0 0.0
        %1481 = vmatpush1.msra.mxu0 0.0
        %1482 = vmatprep.subr.mxu0 0.0
        %1483 = vmatpush1.msra.mxu0 0.0
        %1484 = vmatprep.subr.mxu0 0.0
        %1485 = vmatpush1.msra.mxu0 0.0
        %1486 = vmatprep.subr.mxu0 0.0
        %1487 = vmatpush1.msra.mxu0 0.0
        %1488 = vmatprep.subr.mxu0 0.0
        %1489 = vmatpush1.msra.mxu0 0.0
        %1490 = vmatprep.subr.mxu0 0.0
        %1491 = vmatpush1.msra.mxu0 0.0
        %1492 = vmatprep.subr.mxu0 0.0
        %1493 = vmatpush1.msra.mxu0 0.0
        %1494 = vmatprep.subr.mxu0 0.0
        %1495 = vmatpush1.msra.mxu0 0.0
        %1496 = vmatprep.subr.mxu0 0.0
        %1497 = vmatpush1.msra.mxu0 0.0
        %1498 = vmatprep.subr.mxu0 0.0
        %1499 = vmatpush1.msra.mxu0 0.0
        %1500 = vmatprep.subr.mxu0 0.0
        %1501 = vmatpush1.msra.mxu0 0.0
        %1502 = vmatprep.subr.mxu0 0.0
        %1503 = vmatpush1.msra.mxu0 0.0
        %1504 = vmatprep.subr.mxu0 0.0
        %1505 = vmatpush1.msra.mxu0 0.0
        %1506 = vmatprep.subr.mxu0 0.0
        %1507 = vmatpush1.msra.mxu0 0.0
        %1508 = vmatprep.subr.mxu0 0.0
        %1509 = vmatpush1.msra.mxu0 0.0
        %1510 = vmatprep.subr.mxu0 0.0
        %1511 = vmatpush1.msra.mxu0 0.0
        %1512 = vmatprep.subr.mxu0 0.0
        %1513 = vmatpush1.msra.mxu0 0.0
        %1514 = vmatprep.subr.mxu0 0.0
        %1515 = vmatpush1.msra.mxu0 0.0
        %1516 = vmatprep.subr.mxu0 0.0
        %1517 = vmatpush1.msra.mxu0 0.0
        %1518 = vmatprep.subr.mxu0 0.0
        %1519 = vmatpush1.msra.mxu0 0.0
        %1520 = vmatprep.subr.mxu0 0.0
        %1521 = vmatpush1.msra.mxu0 0.0
        %1522 = vmatprep.subr.mxu0 0.0
        %1523 = vmatpush1.msra.mxu0 0.0
        %1524 = vmatprep.mubr.f32.mxu0 0.0
        %1525 = vmatmul.mubr.f32.gmra.mrb[0].mxu0 %v1458
        %v1526 = vpop.f32.mrb[0].mxu0
        %v1527 = vadd.f32 0.0, %v1526
        %v1528 = vpop.f32.mrb[0].mxu0
        %1529 = vdwg.mxu0
        %1530 = vrot.lane.b32.xlu0 %v359, 100
        %v1531 = vpop.permute.xlu0 %1530
        %1532 = vrot.lane.b32.xlu0 %v356, 68
        %v1533 = vpop.permute.xlu0 %1532
        %v1534 = vsel %vm363, %v1531, 0
        %v1536 = vsel %vm363, %v1533, 0
        %1538 = vmatprep.subr.mxu0 0.0
        %1539 = vmatpush1.xpose.msra.mxu0 %v1536
        %1540 = vmatprep.subr.mxu0 0.0
        %1541 = vmatpush1.xpose.msra.mxu0 0.0
        %1542 = vmatprep.subr.mxu0 0.0
        %1543 = vmatpush1.xpose.msra.mxu0 0.0
        %1544 = vmatprep.subr.mxu0 0.0
        %1545 = vmatpush1.xpose.msra.mxu0 0.0
        %1546 = vmatprep.subr.mxu0 0.0
        %1547 = vmatpush1.xpose.msra.mxu0 0.0
        %1548 = vmatprep.subr.mxu0 0.0
        %1549 = vmatpush1.xpose.msra.mxu0 0.0
        %1550 = vmatprep.subr.mxu0 0.0
        %1551 = vmatpush1.xpose.msra.mxu0 0.0
        %1552 = vmatprep.subr.mxu0 0.0
        %1553 = vmatpush1.xpose.msra.mxu0 0.0
        %1554 = vmatprep.subr.mxu0 0.0
        %1555 = vmatpush1.xpose.msra.mxu0 0.0
        %1556 = vmatprep.subr.mxu0 0.0
        %1557 = vmatpush1.xpose.msra.mxu0 0.0
        %1558 = vmatprep.subr.mxu0 0.0
        %1559 = vmatpush1.xpose.msra.mxu0 0.0
        %1560 = vmatprep.subr.mxu0 0.0
        %1561 = vmatpush1.xpose.msra.mxu0 0.0
        %1562 = vmatprep.subr.mxu0 0.0
        %1563 = vmatpush1.xpose.msra.mxu0 0.0
        %1564 = vmatprep.subr.mxu0 0.0
        %1565 = vmatpush1.xpose.msra.mxu0 0.0
        %1566 = vmatprep.subr.mxu0 0.0
        %1567 = vmatpush1.xpose.msra.mxu0 0.0
        %1568 = vmatprep.subr.mxu0 0.0
        %1569 = vmatpush1.xpose.msra.mxu0 0.0
        %1570 = vmatprep.subr.mxu0 0.0
        %1571 = vmatpush1.xpose.msra.mxu0 0.0
        %1572 = vmatprep.subr.mxu0 0.0
        %1573 = vmatpush1.xpose.msra.mxu0 0.0
        %1574 = vmatprep.subr.mxu0 0.0
        %1575 = vmatpush1.xpose.msra.mxu0 0.0
        %1576 = vmatprep.subr.mxu0 0.0
        %1577 = vmatpush1.xpose.msra.mxu0 0.0
        %1578 = vmatprep.subr.mxu0 0.0
        %1579 = vmatpush1.xpose.msra.mxu0 0.0
        %1580 = vmatprep.subr.mxu0 0.0
        %1581 = vmatpush1.xpose.msra.mxu0 0.0
        %1582 = vmatprep.subr.mxu0 0.0
        %1583 = vmatpush1.xpose.msra.mxu0 0.0
        %1584 = vmatprep.subr.mxu0 0.0
        %1585 = vmatpush1.xpose.msra.mxu0 0.0
        %1586 = vmatprep.subr.mxu0 0.0
        %1587 = vmatpush1.xpose.msra.mxu0 0.0
        %1588 = vmatprep.subr.mxu0 0.0
        %1589 = vmatpush1.xpose.msra.mxu0 0.0
        %1590 = vmatprep.subr.mxu0 0.0
        %1591 = vmatpush1.xpose.msra.mxu0 0.0
        %1592 = vmatprep.subr.mxu0 0.0
        %1593 = vmatpush1.xpose.msra.mxu0 0.0
        %1594 = vmatprep.subr.mxu0 0.0
        %1595 = vmatpush1.xpose.msra.mxu0 0.0
        %1596 = vmatprep.subr.mxu0 0.0
        %1597 = vmatpush1.xpose.msra.mxu0 0.0
        %1598 = vmatprep.subr.mxu0 0.0
        %1599 = vmatpush1.xpose.msra.mxu0 0.0
        %1600 = vmatprep.subr.mxu0 0.0
        %1601 = vmatpush1.xpose.msra.mxu0 0.0
        %1602 = vmatprep.mubr.f32.mxu0 0.0
        %1603 = vmatmul.mubr.f32.gmra.mrb[0].mxu0 %v1534
        %v1604 = vpop.f32.mrb[0].mxu0
        %v1605 = vadd.f32 0.0, %v1604
        %v1606 = vpop.f32.mrb[0].mxu0
        %1607 = vdwg.mxu0
        %v1608 = vsel %vm439, %v1605, -inf
        %1609 = vmax.xlane.f32.xlu0 %v1608
        %v1610 = vpop.xlane.xlu0 %1609
        %v1611 = vsub.f32 %v1605, %v1610
        %v1612 = vmul.f32 %v1611, 1.442695
        %v1613 = vpow.pop %v1612
        %v1614 = vsel %vm439, %v1613, 0.0
        %1615 = vadd.xlane.f32.xlu0 %v1614
        %v1616 = vpop.xlane.xlu0 %1615
        %v1617 = vrcp.pop %v1616
        %v1618 = vmul.f32 %v1613, %v1617
        %s1619 = scalar_lea.vmem %s279, 56 [#allocation9]
        %1620 = vst.msk [vmem:[%s1619] sm:$0xff] %vm439, %v1618
        %1621 = vrot.lane.b32.xlu0 %v356, 36
        %v1622 = vpop.permute.xlu0 %1621
        %v1625 = vsel %vm439, %v1618, 0
        %1627 = vmatprep.subr.mxu0 0.0
        %1628 = vmatpush1.msra.mxu0 %v1622
        %1629 = vmatprep.subr.mxu0 0.0
        %1630 = vmatpush1.msra.mxu0 0.0
        %1631 = vmatprep.subr.mxu0 0.0
        %1632 = vmatpush1.msra.mxu0 0.0
        %1633 = vmatprep.subr.mxu0 0.0
        %1634 = vmatpush1.msra.mxu0 0.0
        %1635 = vmatprep.subr.mxu0 0.0
        %1636 = vmatpush1.msra.mxu0 0.0
        %1637 = vmatprep.subr.mxu0 0.0
        %1638 = vmatpush1.msra.mxu0 0.0
        %1639 = vmatprep.subr.mxu0 0.0
        %1640 = vmatpush1.msra.mxu0 0.0
        %1641 = vmatprep.subr.mxu0 0.0
        %1642 = vmatpush1.msra.mxu0 0.0
        %1643 = vmatprep.subr.mxu0 0.0
        %1644 = vmatpush1.msra.mxu0 0.0
        %1645 = vmatprep.subr.mxu0 0.0
        %1646 = vmatpush1.msra.mxu0 0.0
        %1647 = vmatprep.subr.mxu0 0.0
        %1648 = vmatpush1.msra.mxu0 0.0
        %1649 = vmatprep.subr.mxu0 0.0
        %1650 = vmatpush1.msra.mxu0 0.0
        %1651 = vmatprep.subr.mxu0 0.0
        %1652 = vmatpush1.msra.mxu0 0.0
        %1653 = vmatprep.subr.mxu0 0.0
        %1654 = vmatpush1.msra.mxu0 0.0
        %1655 = vmatprep.subr.mxu0 0.0
        %1656 = vmatpush1.msra.mxu0 0.0
        %1657 = vmatprep.subr.mxu0 0.0
        %1658 = vmatpush1.msra.mxu0 0.0
        %1659 = vmatprep.subr.mxu0 0.0
        %1660 = vmatpush1.msra.mxu0 0.0
        %1661 = vmatprep.subr.mxu0 0.0
        %1662 = vmatpush1.msra.mxu0 0.0
        %1663 = vmatprep.subr.mxu0 0.0
        %1664 = vmatpush1.msra.mxu0 0.0
        %1665 = vmatprep.subr.mxu0 0.0
        %1666 = vmatpush1.msra.mxu0 0.0
        %1667 = vmatprep.subr.mxu0 0.0
        %1668 = vmatpush1.msra.mxu0 0.0
        %1669 = vmatprep.subr.mxu0 0.0
        %1670 = vmatpush1.msra.mxu0 0.0
        %1671 = vmatprep.subr.mxu0 0.0
        %1672 = vmatpush1.msra.mxu0 0.0
        %1673 = vmatprep.subr.mxu0 0.0
        %1674 = vmatpush1.msra.mxu0 0.0
        %1675 = vmatprep.subr.mxu0 0.0
        %1676 = vmatpush1.msra.mxu0 0.0
        %1677 = vmatprep.subr.mxu0 0.0
        %1678 = vmatpush1.msra.mxu0 0.0
        %1679 = vmatprep.subr.mxu0 0.0
        %1680 = vmatpush1.msra.mxu0 0.0
        %1681 = vmatprep.subr.mxu0 0.0
        %1682 = vmatpush1.msra.mxu0 0.0
        %1683 = vmatprep.subr.mxu0 0.0
        %1684 = vmatpush1.msra.mxu0 0.0
        %1685 = vmatprep.subr.mxu0 0.0
        %1686 = vmatpush1.msra.mxu0 0.0
        %1687 = vmatprep.subr.mxu0 0.0
        %1688 = vmatpush1.msra.mxu0 0.0
        %1689 = vmatprep.subr.mxu0 0.0
        %1690 = vmatpush1.msra.mxu0 0.0
        %1691 = vmatprep.mubr.f32.mxu0 0.0
        %1692 = vmatmul.mubr.f32.gmra.mrb[0].mxu0 %v1625
        %v1693 = vpop.f32.mrb[0].mxu0
        %v1694 = vadd.f32 0.0, %v1693
        %v1695 = vpop.f32.mrb[0].mxu0
        %1696 = vdwg.mxu0
        %1698 = vrot.lane.b32.xlu0 %v692, 4
        %v1699 = vpop.permute.xlu0 %1698
        %1702 = vrot.lane.b32.xlu0 %v859, 8
        %v1703 = vpop.permute.xlu0 %1702
        %1706 = vrot.lane.b32.xlu0 %v1026, 12
        %v1707 = vpop.permute.xlu0 %1706
        %1710 = vrot.lane.b32.xlu0 %v1193, 16
        %v1711 = vpop.permute.xlu0 %1710
        %1714 = vrot.lane.b32.xlu0 %v1360, 20
        %v1715 = vpop.permute.xlu0 %1714
        %1718 = vrot.lane.b32.xlu0 %v1527, 24
        %v1719 = vpop.permute.xlu0 %1718
        %1722 = vrot.lane.b32.xlu0 %v1694, 28
        %v1723 = vpop.permute.xlu0 %1722
        %v1725 = vsel %vm363, %v525, %v1699
        %v1726 = vsel %vm439, %v1725, %v1703
        %vm1727 = vcmask 97280
        %v1728 = vsel %vm1727, %v1726, %v1707
        %vm1729 = vcmask 130048
        %v1730 = vsel %vm1729, %v1728, %v1711
        %vm1731 = vcmask 162816
        %v1732 = vsel %vm1731, %v1730, %v1715
        %vm1733 = vcmask 195584
        %v1734 = vsel %vm1733, %v1732, %v1719
        %vm1735 = vcmask 228352
        %v1736 = vsel %vm1735, %v1734, %v1723
        %v1737 = vld [vmem:[#allocation7] sm:$0xff]
        %v1738 = vld [vmem:[#allocation7 + $0x8] sm:$0xff]
        %v1739 = vld [vmem:[#allocation7 + $0x10] sm:$0xff]
        %v1740 = vld [vmem:[#allocation7 + $0x18] sm:$0xff]
        %v1741 = vld [vmem:[%s3] sm:$0x1]
        %v1743 = vlaneseq
        %v1744 = vshrl.u32 %v1743, 7
        %v1745 = vsub.s32 0, %v1744
        %v1746 = vrot.slane %v1741, %v1745
        %v1749 = vsel %vm285, %v1736, 0
        %1751 = vmatprep.subr.mxu0 0.0
        %1752 = vmatpush1.msra.mxu0 %v1737
        %1753 = vmatprep.subr.mxu0 0.0
        %1754 = vmatpush1.msra.mxu0 %v1738
        %1755 = vmatprep.subr.mxu0 0.0
        %1756 = vmatpush1.msra.mxu0 %v1739
        %1757 = vmatprep.subr.mxu0 0.0
        %1758 = vmatpush1.msra.mxu0 %v1740
        %1759 = vmatprep.subr.mxu0 0.0
        %1760 = vmatpush1.msra.mxu0 0.0
        %1761 = vmatprep.subr.mxu0 0.0
        %1762 = vmatpush1.msra.mxu0 0.0
        %1763 = vmatprep.subr.mxu0 0.0
        %1764 = vmatpush1.msra.mxu0 0.0
        %1765 = vmatprep.subr.mxu0 0.0
        %1766 = vmatpush1.msra.mxu0 0.0
        %1767 = vmatprep.subr.mxu0 0.0
        %1768 = vmatpush1.msra.mxu0 0.0
        %1769 = vmatprep.subr.mxu0 0.0
        %1770 = vmatpush1.msra.mxu0 0.0
        %1771 = vmatprep.subr.mxu0 0.0
        %1772 = vmatpush1.msra.mxu0 0.0
        %1773 = vmatprep.subr.mxu0 0.0
        %1774 = vmatpush1.msra.mxu0 0.0
        %1775 = vmatprep.subr.mxu0 0.0
        %1776 = vmatpush1.msra.mxu0 0.0
        %1777 = vmatprep.subr.mxu0 0.0
        %1778 = vmatpush1.msra.mxu0 0.0
        %1779 = vmatprep.subr.mxu0 0.0
        %1780 = vmatpush1.msra.mxu0 0.0
        %1781 = vmatprep.subr.mxu0 0.0
        %1782 = vmatpush1.msra.mxu0 0.0
        %1783 = vmatprep.subr.mxu0 0.0
        %1784 = vmatpush1.msra.mxu0 0.0
        %1785 = vmatprep.subr.mxu0 0.0
        %1786 = vmatpush1.msra.mxu0 0.0
        %1787 = vmatprep.subr.mxu0 0.0
        %1788 = vmatpush1.msra.mxu0 0.0
        %1789 = vmatprep.subr.mxu0 0.0
        %1790 = vmatpush1.msra.mxu0 0.0
        %1791 = vmatprep.subr.mxu0 0.0
        %1792 = vmatpush1.msra.mxu0 0.0
        %1793 = vmatprep.subr.mxu0 0.0
        %1794 = vmatpush1.msra.mxu0 0.0
        %1795 = vmatprep.subr.mxu0 0.0
        %1796 = vmatpush1.msra.mxu0 0.0
        %1797 = vmatprep.subr.mxu0 0.0
        %1798 = vmatpush1.msra.mxu0 0.0
        %1799 = vmatprep.subr.mxu0 0.0
        %1800 = vmatpush1.msra.mxu0 0.0
        %1801 = vmatprep.subr.mxu0 0.0
        %1802 = vmatpush1.msra.mxu0 0.0
        %1803 = vmatprep.subr.mxu0 0.0
        %1804 = vmatpush1.msra.mxu0 0.0
        %1805 = vmatprep.subr.mxu0 0.0
        %1806 = vmatpush1.msra.mxu0 0.0
        %1807 = vmatprep.subr.mxu0 0.0
        %1808 = vmatpush1.msra.mxu0 0.0
        %1809 = vmatprep.subr.mxu0 0.0
        %1810 = vmatpush1.msra.mxu0 0.0
        %1811 = vmatprep.subr.mxu0 0.0
        %1812 = vmatpush1.msra.mxu0 0.0
        %1813 = vmatprep.subr.mxu0 0.0
        %1814 = vmatpush1.msra.mxu0 0.0
        %1815 = vmatprep.mubr.f32.mxu0 0.0
        %1816 = vmatmul.mubr.f32.gmra.mrb[0].mxu0 %v1749
        %v1817 = vpop.f32.mrb[0].mxu0
        %v1818 = vadd.f32 %v1746, %v1817
        %v1819 = vpop.f32.mrb[0].mxu0
        %1820 = vdwg.mxu0
        %1821 = vst.msk [vmem:[%s272] sm:$0xff] %vm285, %v1818
        %s1822 = sand.u32 %s124, 1
        %s1823 = scalar_lea.sflag [#allocation4], %s1822
        %s1824 = sand.u32 %s124, 1
        %s1825 = smul.addr %s1824, 8
        %s1826 = scalar_lea.vmem [#allocation8], %s1825
        %s1827 = sand.u32 %s150, 1
        %s1828 = scalar_lea.sflag [#allocation10], %s1827
        %s1829 = sand.u32 %s150, 1
        %s1830 = smul.addr %s1829, 64
        %s1831 = scalar_lea.vmem [#allocation9], %s1830
        // Predicated region
        $region49: #{tpu_custom_call.1} parent=35 // pred_check
          %p1832 = pneg %p134
        $region50: #{tpu_custom_call.1} parent=35 // pred_check_branch
          %1834 = sbr.rel (%p1832) target = $region52
        $region51: #{tpu_custom_call.1} parent=35 // pred_region
          %s1836 = ssub.s32 128, 128
          %1837 = vsyncadd %s1823, %s1836
          %s1838 = smul.addr %s27, 128
          %s1839 = scalar_lea.hbm %s4, %s1838
          %s1841 = sshll.u32 %s1826, 4
          %s1842 = int_to_ptr.vmem [resolvable:$true] %s1841
          %1844 = dma.vmem_to_hbm [thread:$0]  %s1842, 128, %s1839, %s1823
        $region52: #{tpu_custom_call.1} parent=35 // pred_fallthru
          _
        // Predicated region
        $region53: #{tpu_custom_call.1} parent=35 // pred_check
          %p1845 = pneg %p160
        $region54: #{tpu_custom_call.1} parent=35 // pred_check_branch
          %1847 = sbr.rel (%p1845) target = $region56
        $region55: #{tpu_custom_call.1} parent=35 // pred_region
          %s1849 = ssub.s32 1024, 1024
          %1850 = vsyncadd %s1828, %s1849
          %s1851 = smul.addr %s27, 8
          %s1852 = smul.addr %s1851, 128
          %s1853 = scalar_lea.hbm %s5, %s1852
          %s1854 = sshll.u32 %s1831, 4
          %s1855 = int_to_ptr.vmem [resolvable:$true] %s1854
          %1860 = dma.vmem_to_hbm [thread:$0]  %s1855, 1024, %s1853, %s1828, 128, 128, 8
        $region56: #{tpu_custom_call.1} parent=35 // pred_fallthru
          _
      $region36: #{tpu_custom_call.1} parent=5 // pred_fallthru
        _
      %p1861 = scmp.le.s32.totalorder 2, %s22
      // Predicated region
      $region57: #{tpu_custom_call.1} parent=5 // pred_check
        %p1862 = pneg %p1861
      $region58: #{tpu_custom_call.1} parent=5 // pred_check_branch
        %1864 = sbr.rel (%p1862) target = $region60
      $region59: #{tpu_custom_call.1} parent=5 // pred_region
        %s1865 = ssub.s32 %s22, 2
        // Predicated region
        $region61: #{tpu_custom_call.1} parent=59 // pred_check
          %p1866 = pneg %p140
        $region62: #{tpu_custom_call.1} parent=59 // pred_check_branch
          %1868 = sbr.rel (%p1866) target = $region64
        $region63: #{tpu_custom_call.1} parent=59 // pred_region
          %s1869 = sand.u32 %s125, 1
          %s1870 = scalar_lea.sflag [#allocation4], %s1869
          %s1871 = sand.u32 %s125, 1
          %s1872 = smul.addr %s1871, 8
          %s1873 = scalar_lea.vmem [#allocation8], %s1872
          %1874 = dma.done %s1870, 128
        $region64: #{tpu_custom_call.1} parent=59 // pred_fallthru
          _
        // Predicated region
        $region65: #{tpu_custom_call.1} parent=59 // pred_check
          %p1875 = pneg %p166
        $region66: #{tpu_custom_call.1} parent=59 // pred_check_branch
          %1877 = sbr.rel (%p1875) target = $region68
        $region67: #{tpu_custom_call.1} parent=59 // pred_region
          %s1878 = sand.u32 %s151, 1
          %s1879 = scalar_lea.sflag [#allocation10], %s1878
          %s1880 = sand.u32 %s151, 1
          %s1881 = smul.addr %s1880, 64
          %s1882 = scalar_lea.vmem [#allocation9], %s1881
          %1883 = dma.done %s1879, 1024
        $region68: #{tpu_custom_call.1} parent=59 // pred_fallthru
          _
      $region60: #{tpu_custom_call.1} parent=5 // pred_fallthru
        _
    $region6: #{tpu_custom_call.1} parent=1 // loop_footer
      %s26 = sadd.s32 1, %s22
    $region7: #{tpu_custom_call.1} parent=1 // loop_footer_branch
      %21 = sbr.rel target = $region3
    $region8: #{tpu_custom_call.1} parent=1 // loop_exit
      _
    %1884 = vsyncpa [#allocation3], 1
    %s1885 = scalar_lea.sflag [#allocation3], 1
    %1886 = vsyncpa %s1885, 1
    %1887 = vsyncpa [#allocation6], 1
    %1888 = vsyncpa [#allocation4], 1
    %s1889 = scalar_lea.sflag [#allocation4], 1
    %1890 = vsyncpa %s1889, 1
    %1891 = vsyncpa [#allocation10], 1
    %s1892 = scalar_lea.sflag [#allocation10], 1
    %1893 = vsyncpa %s1892, 1

</llo_original>
